<compile_context>
chip_gen: v5e
topology: v5e:2x2
jax: 0.10.0
libtpu: 0.0.40
codegen_flags: <defaults>
</compile_context>

<pallas_src>
import functools
import math

import jax
import jax.numpy as jnp
from jax.experimental import pallas as pl
from jax.experimental.pallas import tpu as pltpu


def _layernorm(z, g, b, eps=1e-5):
    # Fused statistics: one sweep for E[z] and E[z^2], var = E[z^2] - mean^2.
    mean = jnp.mean(z, axis=-1, keepdims=True)
    mean_sq = jnp.mean(z * z, axis=-1, keepdims=True)
    var = mean_sq - mean * mean
    return (z - mean) * jax.lax.rsqrt(var + eps) * g + b


def _attention_kernel(h_ref, x_ref,
                      ln1g_ref, ln1b_ref, ln2g_ref, ln2b_ref,
                      wq_ref, bq_ref, wk_ref, bk_ref, wv_ref, bv_ref,
                      wo_ref, bo_ref,
                      out_ref,
                      *, num_heads, batch_block, q_len, kv_len,
                      qk_per_head, v_per_head, matmul_dtype):
    BB, M, N = batch_block, q_len, kv_len

    h = h_ref[...].astype(jnp.float32)   # (BB*M, Dq)  pre-LN latents (residual)
    x = x_ref[...].astype(jnp.float32)   # (BB*N, Dkv) cross-attention inputs

    # LayerNorms (fp32 elementwise; layernorm1 -> queries, layernorm2 -> kv)
    h_ln = _layernorm(h, ln1g_ref[...], ln1b_ref[...])
    x_ln = _layernorm(x, ln2g_ref[...], ln2b_ref[...])

    def mm(a):  # optional bf16 operands for the MXU (accumulation stays fp32)
        return a if matmul_dtype is None else a.astype(matmul_dtype)

    h_mm = mm(h_ln)
    x_mm = mm(x_ln)

    inv_sqrt_d = 1.0 / math.sqrt(qk_per_head)

    # output = query residual + output bias; per-head contributions added below
    out = h + bo_ref[...]

    for hd in range(num_heads):  # static loop; head is a leading-axis index
        q = jnp.dot(h_mm, wq_ref[hd], preferred_element_type=jnp.float32) + bq_ref[hd]
        k = jnp.dot(x_mm, wk_ref[hd], preferred_element_type=jnp.float32) + bk_ref[hd]
        v = jnp.dot(x_mm, wv_ref[hd], preferred_element_type=jnp.float32) + bv_ref[hd]

        # split the folded batch back out on the leading axis (layout-trivial:
        # M and N are multiples of 8, the lane dim is untouched)
        q3 = q.reshape(BB, M, qk_per_head)
        k3 = k.reshape(BB, N, qk_per_head)
        v3 = v.reshape(BB, N, v_per_head)

        # scores: contract last dims directly -- no explicit k.T
        scores = jnp.einsum("bmd,bnd->bmn", mm(q3), mm(k3),
                            preferred_element_type=jnp.float32) * inv_sqrt_d
        m_max = jnp.max(scores, axis=-1, keepdims=True)
        p = jnp.exp(scores - m_max)
        denom = jnp.sum(p, axis=-1, keepdims=True)
        p = p * pl.reciprocal(denom, approx=True)   # EUP vrcp slot

        ctx = jnp.einsum("bmn,bnd->bmd", mm(p), mm(v3),
                         preferred_element_type=jnp.float32)
        ctx2 = ctx.reshape(BB * M, v_per_head)

        # fold this head straight into the output dense (no head concat)
        out = out + jnp.dot(mm(ctx2), wo_ref[hd],
                            preferred_element_type=jnp.float32)

    out_ref[...] = out.astype(out_ref.dtype)


def perceiver_attention(hidden_states, inputs, params, *, num_heads,
                        batch_block=None, matmul_dtype=None):
    """hidden_states: (B, M, Dq) latents; inputs: (B, N, Dkv). Returns (B, M, Dq)."""
    B, M, Dq = hidden_states.shape
    _, N, Dkv = inputs.shape
    QK = params["wq"].shape[1]
    V = params["wv"].shape[1]
    Dout = params["wo"].shape[1]
    assert QK % num_heads == 0 and V % num_heads == 0
    assert Dout == Dq, "query residual requires output_channels == q_dim"
    dqk, dv = QK // num_heads, V // num_heads

    if batch_block is None:
        # Fold the batch into the row axis, but keep >= 2 grid steps when the
        # batch allows it (one per v7x TensorCore).
        batch_block = B if (B < 2 or B % 2 != 0) else B // 2
    assert B % batch_block == 0
    num_steps = B // batch_block

    # Fold batch into rows; these XLA reshapes are free (contiguous).
    h2 = hidden_states.reshape(B * M, Dq)
    x2 = inputs.reshape(B * N, Dkv)

    # Stack per-head weights on a leading axis -> head indexing is free in the
    # kernel (no lane-axis slicing, no concat of head outputs).
    H = num_heads
    wq_s = params["wq"].reshape(Dq, H, dqk).transpose(1, 0, 2)    # (H, Dq, dqk)
    bq_s = params["bq"].reshape(1, H, dqk).transpose(1, 0, 2)     # (H, 1, dqk)
    wk_s = params["wk"].reshape(Dkv, H, dqk).transpose(1, 0, 2)   # (H, Dkv, dqk)
    bk_s = params["bk"].reshape(1, H, dqk).transpose(1, 0, 2)     # (H, 1, dqk)
    wv_s = params["wv"].reshape(Dkv, H, dv).transpose(1, 0, 2)    # (H, Dkv, dv)
    bv_s = params["bv"].reshape(1, H, dv).transpose(1, 0, 2)      # (H, 1, dv)
    wo_s = params["wo"].reshape(H, dv, Dout)                      # (H, dv, Dout)
    bo = params["bo"]                                             # (1, Dout)

    if matmul_dtype is not None:   # bf16 MXU operands for v6e/v7x at scale
        wq_s, wk_s, wv_s, wo_s = (w.astype(matmul_dtype)
                                  for w in (wq_s, wk_s, wv_s, wo_s))

    param_args = [params["ln1_g"], params["ln1_b"],
                  params["ln2_g"], params["ln2_b"],
                  wq_s, bq_s, wk_s, bk_s, wv_s, bv_s, wo_s, bo]

    def full_spec(a):
        # un-tiled parameter: whole array, same block for every grid step
        nd = a.ndim
        return pl.BlockSpec(a.shape, lambda i: (0,) * nd)

    in_specs = (
        [pl.BlockSpec((batch_block * M, Dq), lambda i: (i, 0)),    # folded latents
         pl.BlockSpec((batch_block * N, Dkv), lambda i: (i, 0))]   # folded inputs
        + [full_spec(a) for a in param_args]
    )
    out_spec = pl.BlockSpec((batch_block * M, Dq), lambda i: (i, 0))

    kernel = functools.partial(
        _attention_kernel,
        num_heads=num_heads, batch_block=batch_block,
        q_len=M, kv_len=N, qk_per_head=dqk, v_per_head=dv,
        matmul_dtype=matmul_dtype)

    out2 = pl.pallas_call(
        kernel,
        out_shape=jax.ShapeDtypeStruct((B * M, Dq), hidden_states.dtype),
        grid=(num_steps,),
        in_specs=in_specs,
        out_specs=out_spec,
        compiler_params=pltpu.CompilerParams(
            dimension_semantics=("parallel",)),
        # NOTE: at realistic Perceiver sizes, set vmem_limit_bytes explicitly
        # and re-budget the un-tiled weight blocks against v7x's 64 MiB VMEM.
    )(h2, x2, *param_args)

    return out2.reshape(B, M, Dq)


def perceiver_attention_ref(h, x, params, *, num_heads):
    """Pure-JAX reference mirroring the PyTorch forward (eval mode)."""
    def ln(z, g, b, eps=1e-5):
        mu = jnp.mean(z, axis=-1, keepdims=True)
        var = jnp.mean((z - mu) ** 2, axis=-1, keepdims=True)
        return (z - mu) / jnp.sqrt(var + eps) * g + b

    h_ln = ln(h, params["ln1_g"], params["ln1_b"])
    x_ln = ln(x, params["ln2_g"], params["ln2_b"])
    q = h_ln @ params["wq"] + params["bq"]
    k = x_ln @ params["wk"] + params["bk"]
    v = x_ln @ params["wv"] + params["bv"]
    B, M, QK = q.shape
    N = k.shape[1]
    Vc = v.shape[-1]
    dqk, dv = QK // num_heads, Vc // num_heads
    qh = q.reshape(B, M, num_heads, dqk).transpose(0, 2, 1, 3)
    kh = k.reshape(B, N, num_heads, dqk).transpose(0, 2, 1, 3)
    vh = v.reshape(B, N, num_heads, dv).transpose(0, 2, 1, 3)
    scores = jnp.einsum("bhmd,bhnd->bhmn", qh, kh) / math.sqrt(dqk)
    probs = jax.nn.softmax(scores, axis=-1)
    ctx = jnp.einsum("bhmn,bhnd->bhmd", probs, vh)
    ctx = ctx.transpose(0, 2, 1, 3).reshape(B, M, Vc)
    out = ctx @ params["wo"] + params["bo"]
    return out + h


if __name__ == "__main__":
    # Cross-attention config: batch=2, latents M=8 with q_dim=32, inputs N=16
    # with kv_dim=64, qk_channels = v_channels = 32, num_heads=2,
    # output_channels = q_dim = 32, use_query_residual=True, dropout p=0.
    B, M, N = 2, 8, 16
    q_dim, kv_dim = 32, 64
    qk_channels = q_dim
    v_channels = qk_channels
    num_heads = 2
    out_channels = q_dim

    key = jax.random.PRNGKey(0)
    ks = jax.random.split(key, 8)

    hidden_states = jax.random.normal(ks[0], (B, M, q_dim), dtype=jnp.float32)
    inputs = jax.random.normal(ks[1], (B, N, kv_dim), dtype=jnp.float32)

    def linear_params(k, d_in, d_out):
        kw, kb = jax.random.split(k)
        bound = 1.0 / math.sqrt(d_in)
        w = jax.random.uniform(kw, (d_in, d_out), minval=-bound, maxval=bound,
                               dtype=jnp.float32)
        b = jax.random.uniform(kb, (1, d_out), minval=-bound, maxval=bound,
                               dtype=jnp.float32)
        return w, b

    wq, bq = linear_params(ks[2], q_dim, qk_channels)
    wk, bk = linear_params(ks[3], kv_dim, qk_channels)
    wv, bv = linear_params(ks[4], kv_dim, v_channels)
    wo, bo = linear_params(ks[5], v_channels, out_channels)

    params = {
        # LayerNorm params kept 2-D (1, D) for clean lane layout / broadcast
        "ln1_g": jnp.ones((1, q_dim), jnp.float32),
        "ln1_b": jnp.zeros((1, q_dim), jnp.float32),
        "ln2_g": jnp.ones((1, kv_dim), jnp.float32),
        "ln2_b": jnp.zeros((1, kv_dim), jnp.float32),
        "wq": wq, "bq": bq, "wk": wk, "bk": bk,
        "wv": wv, "bv": bv, "wo": wo, "bo": bo,
    }

    ref = perceiver_attention_ref(hidden_states, inputs, params,
                                  num_heads=num_heads)

    # Default: batch split across 2 grid steps (one per v7x TensorCore).
    out = perceiver_attention(hidden_states, inputs, params, num_heads=num_heads)
    out = jax.block_until_ready(out)
    assert out.shape == (B, M, q_dim)
    # tolerance slightly loosened from 1e-4 because of the approx (EUP) softmax
    # reciprocal; real bugs produce O(1) errors.
    assert jnp.allclose(out, ref, atol=2e-3, rtol=2e-3), "mismatch (default grid)"

    # Fully batch-folded variant: single grid step, batch folded into rows.
    out_folded = perceiver_attention(hidden_states, inputs, params,
                                     num_heads=num_heads, batch_block=B)
    out_folded = jax.block_until_ready(out_folded)
    assert jnp.allclose(out_folded, ref, atol=2e-3, rtol=2e-3), "mismatch (folded)"

    print("KERNEL_OK")
</pallas_src>

<mosaic_0001>
module attributes {stable_mosaic.version = 11 : i64} {
  func.func @_attention_kernel(%arg0: i32, %arg1: memref<8x32xf32, #tpu.memory_space<vmem>>, %arg2: memref<16x64xf32, #tpu.memory_space<vmem>>, %arg3: memref<1x32xf32, #tpu.memory_space<vmem>>, %arg4: memref<1x32xf32, #tpu.memory_space<vmem>>, %arg5: memref<1x64xf32, #tpu.memory_space<vmem>>, %arg6: memref<1x64xf32, #tpu.memory_space<vmem>>, %arg7: memref<2x32x16xf32, #tpu.memory_space<vmem>>, %arg8: memref<2x1x16xf32, #tpu.memory_space<vmem>>, %arg9: memref<2x64x16xf32, #tpu.memory_space<vmem>>, %arg10: memref<2x1x16xf32, #tpu.memory_space<vmem>>, %arg11: memref<2x64x16xf32, #tpu.memory_space<vmem>>, %arg12: memref<2x1x16xf32, #tpu.memory_space<vmem>>, %arg13: memref<2x16x32xf32, #tpu.memory_space<vmem>>, %arg14: memref<1x32xf32, #tpu.memory_space<vmem>>, %arg15: memref<8x32xf32, #tpu.memory_space<vmem>>) attributes {dimension_semantics = [#tpu.dimension_semantics<parallel>], iteration_bounds = array<i64: 2>, scalar_prefetch = 0 : i64, scratch_operands = 0 : i64, tpu.core_type = #tpu.core_type<tc>, window_params = [{transform_indices = @transform_0, window_bounds = array<i64: 8, 32>}, {transform_indices = @transform_1, window_bounds = array<i64: 16, 64>}, {pipeline_mode = #tpu.pipeline_mode<synchronous>, transform_indices = @transform_2, window_bounds = array<i64: 1, 32>}, {pipeline_mode = #tpu.pipeline_mode<synchronous>, transform_indices = @transform_3, window_bounds = array<i64: 1, 32>}, {pipeline_mode = #tpu.pipeline_mode<synchronous>, transform_indices = @transform_4, window_bounds = array<i64: 1, 64>}, {pipeline_mode = #tpu.pipeline_mode<synchronous>, transform_indices = @transform_5, window_bounds = array<i64: 1, 64>}, {pipeline_mode = #tpu.pipeline_mode<synchronous>, transform_indices = @transform_6, window_bounds = array<i64: 2, 32, 16>}, {pipeline_mode = #tpu.pipeline_mode<synchronous>, transform_indices = @transform_7, window_bounds = array<i64: 2, 1, 16>}, {pipeline_mode = #tpu.pipeline_mode<synchronous>, transform_indices = @transform_8, window_bounds = array<i64: 2, 64, 16>}, {pipeline_mode = #tpu.pipeline_mode<synchronous>, transform_indices = @transform_9, window_bounds = array<i64: 2, 1, 16>}, {pipeline_mode = #tpu.pipeline_mode<synchronous>, transform_indices = @transform_10, window_bounds = array<i64: 2, 64, 16>}, {pipeline_mode = #tpu.pipeline_mode<synchronous>, transform_indices = @transform_11, window_bounds = array<i64: 2, 1, 16>}, {pipeline_mode = #tpu.pipeline_mode<synchronous>, transform_indices = @transform_12, window_bounds = array<i64: 2, 16, 32>}, {pipeline_mode = #tpu.pipeline_mode<synchronous>, transform_indices = @transform_13, window_bounds = array<i64: 1, 32>}, {transform_indices = @transform_14, window_bounds = array<i64: 8, 32>}]} {
    %c0 = arith.constant 0 : index
    %c0_0 = arith.constant 0 : index
    %0 = vector.load %arg1[%c0, %c0_0] : memref<8x32xf32, #tpu.memory_space<vmem>>, vector<8x32xf32>
    %c0_1 = arith.constant 0 : index
    %c0_2 = arith.constant 0 : index
    %1 = vector.load %arg2[%c0_1, %c0_2] : memref<16x64xf32, #tpu.memory_space<vmem>>, vector<16x64xf32>
    %c0_3 = arith.constant 0 : index
    %c0_4 = arith.constant 0 : index
    %2 = vector.load %arg3[%c0_3, %c0_4] : memref<1x32xf32, #tpu.memory_space<vmem>>, vector<1x32xf32>
    %c0_5 = arith.constant 0 : index
    %c0_6 = arith.constant 0 : index
    %3 = vector.load %arg4[%c0_5, %c0_6] : memref<1x32xf32, #tpu.memory_space<vmem>>, vector<1x32xf32>
    %cst = arith.constant dense<0.000000e+00> : vector<8xf32>
    %4 = vector.multi_reduction <add>, %0, %cst [1] : vector<8x32xf32> to vector<8xf32>
    %5 = vector.shape_cast %4 : vector<8xf32> to vector<8x1xf32>
    %cst_7 = arith.constant 3.200000e+01 : f32
    %6 = vector.broadcast %cst_7 : f32 to vector<8x1xf32>
    %7 = arith.divf %5, %6 : vector<8x1xf32>
    %8 = arith.mulf %0, %0 : vector<8x32xf32>
    %cst_8 = arith.constant dense<0.000000e+00> : vector<8xf32>
    %9 = vector.multi_reduction <add>, %8, %cst_8 [1] : vector<8x32xf32> to vector<8xf32>
    %10 = vector.shape_cast %9 : vector<8xf32> to vector<8x1xf32>
    %cst_9 = arith.constant 3.200000e+01 : f32
    %11 = vector.broadcast %cst_9 : f32 to vector<8x1xf32>
    %12 = arith.divf %10, %11 : vector<8x1xf32>
    %13 = arith.mulf %7, %7 : vector<8x1xf32>
    %14 = arith.subf %12, %13 : vector<8x1xf32>
    %15 = vector.broadcast %7 : vector<8x1xf32> to vector<8x32xf32>
    %16 = arith.subf %0, %15 : vector<8x32xf32>
    %cst_10 = arith.constant 9.99999974E-6 : f32
    %17 = vector.broadcast %cst_10 : f32 to vector<8x1xf32>
    %18 = arith.addf %14, %17 : vector<8x1xf32>
    %19 = math.rsqrt %18 : vector<8x1xf32>
    %20 = vector.broadcast %19 : vector<8x1xf32> to vector<8x32xf32>
    %21 = arith.mulf %16, %20 : vector<8x32xf32>
    %22 = vector.broadcast %2 : vector<1x32xf32> to vector<8x32xf32>
    %23 = arith.mulf %21, %22 : vector<8x32xf32>
    %24 = vector.broadcast %3 : vector<1x32xf32> to vector<8x32xf32>
    %25 = arith.addf %23, %24 : vector<8x32xf32>
    %c0_11 = arith.constant 0 : index
    %c0_12 = arith.constant 0 : index
    %26 = vector.load %arg5[%c0_11, %c0_12] : memref<1x64xf32, #tpu.memory_space<vmem>>, vector<1x64xf32>
    %c0_13 = arith.constant 0 : index
    %c0_14 = arith.constant 0 : index
    %27 = vector.load %arg6[%c0_13, %c0_14] : memref<1x64xf32, #tpu.memory_space<vmem>>, vector<1x64xf32>
    %cst_15 = arith.constant dense<0.000000e+00> : vector<16xf32>
    %28 = vector.multi_reduction <add>, %1, %cst_15 [1] : vector<16x64xf32> to vector<16xf32>
    %29 = vector.shape_cast %28 : vector<16xf32> to vector<16x1xf32>
    %cst_16 = arith.constant 6.400000e+01 : f32
    %30 = vector.broadcast %cst_16 : f32 to vector<16x1xf32>
    %31 = arith.divf %29, %30 : vector<16x1xf32>
    %32 = arith.mulf %1, %1 : vector<16x64xf32>
    %cst_17 = arith.constant dense<0.000000e+00> : vector<16xf32>
    %33 = vector.multi_reduction <add>, %32, %cst_17 [1] : vector<16x64xf32> to vector<16xf32>
    %34 = vector.shape_cast %33 : vector<16xf32> to vector<16x1xf32>
    %cst_18 = arith.constant 6.400000e+01 : f32
    %35 = vector.broadcast %cst_18 : f32 to vector<16x1xf32>
    %36 = arith.divf %34, %35 : vector<16x1xf32>
    %37 = arith.mulf %31, %31 : vector<16x1xf32>
    %38 = arith.subf %36, %37 : vector<16x1xf32>
    %39 = vector.broadcast %31 : vector<16x1xf32> to vector<16x64xf32>
    %40 = arith.subf %1, %39 : vector<16x64xf32>
    %cst_19 = arith.constant 9.99999974E-6 : f32
    %41 = vector.broadcast %cst_19 : f32 to vector<16x1xf32>
    %42 = arith.addf %38, %41 : vector<16x1xf32>
    %43 = math.rsqrt %42 : vector<16x1xf32>
    %44 = vector.broadcast %43 : vector<16x1xf32> to vector<16x64xf32>
    %45 = arith.mulf %40, %44 : vector<16x64xf32>
    %46 = vector.broadcast %26 : vector<1x64xf32> to vector<16x64xf32>
    %47 = arith.mulf %45, %46 : vector<16x64xf32>
    %48 = vector.broadcast %27 : vector<1x64xf32> to vector<16x64xf32>
    %49 = arith.addf %47, %48 : vector<16x64xf32>
    %c0_20 = arith.constant 0 : index
    %c0_21 = arith.constant 0 : index
    %50 = vector.load %arg14[%c0_20, %c0_21] : memref<1x32xf32, #tpu.memory_space<vmem>>, vector<1x32xf32>
    %51 = vector.broadcast %50 : vector<1x32xf32> to vector<8x32xf32>
    %52 = arith.addf %0, %51 : vector<8x32xf32>
    %c0_22 = arith.constant 0 : index
    %c0_23 = arith.constant 0 : index
    %c0_24 = arith.constant 0 : index
    %53 = vector.load %arg7[%c0_22, %c0_23, %c0_24] : memref<2x32x16xf32, #tpu.memory_space<vmem>>, vector<1x32x16xf32>
    %54 = vector.shape_cast %53 : vector<1x32x16xf32> to vector<32x16xf32>
    %cst_25 = arith.constant dense<0.000000e+00> : vector<8x16xf32>
    %55 = tpu.matmul %25, %54, %cst_25 {dimension_numbers = #tpu.dot_dimension_numbers<[1], [0], [0], [1], [0, 0, 1, 1], [], []>} : vector<8x32xf32>, vector<32x16xf32>, vector<8x16xf32> -> vector<8x16xf32>
    %c0_26 = arith.constant 0 : index
    %c0_27 = arith.constant 0 : index
    %c0_28 = arith.constant 0 : index
    %56 = vector.load %arg8[%c0_26, %c0_27, %c0_28] : memref<2x1x16xf32, #tpu.memory_space<vmem>>, vector<1x1x16xf32>
    %57 = vector.shape_cast %56 : vector<1x1x16xf32> to vector<1x16xf32>
    %58 = vector.broadcast %57 : vector<1x16xf32> to vector<8x16xf32>
    %59 = arith.addf %55, %58 : vector<8x16xf32>
    %c0_29 = arith.constant 0 : index
    %c0_30 = arith.constant 0 : index
    %c0_31 = arith.constant 0 : index
    %60 = vector.load %arg9[%c0_29, %c0_30, %c0_31] : memref<2x64x16xf32, #tpu.memory_space<vmem>>, vector<1x64x16xf32>
    %61 = vector.shape_cast %60 : vector<1x64x16xf32> to vector<64x16xf32>
    %cst_32 = arith.constant dense<0.000000e+00> : vector<16x16xf32>
    %62 = tpu.matmul %49, %61, %cst_32 {dimension_numbers = #tpu.dot_dimension_numbers<[1], [0], [0], [1], [0, 0, 1, 1], [], []>} : vector<16x64xf32>, vector<64x16xf32>, vector<16x16xf32> -> vector<16x16xf32>
    %c0_33 = arith.constant 0 : index
    %c0_34 = arith.constant 0 : index
    %c0_35 = arith.constant 0 : index
    %63 = vector.load %arg10[%c0_33, %c0_34, %c0_35] : memref<2x1x16xf32, #tpu.memory_space<vmem>>, vector<1x1x16xf32>
    %64 = vector.shape_cast %63 : vector<1x1x16xf32> to vector<1x16xf32>
    %65 = vector.broadcast %64 : vector<1x16xf32> to vector<16x16xf32>
    %66 = arith.addf %62, %65 : vector<16x16xf32>
    %c0_36 = arith.constant 0 : index
    %c0_37 = arith.constant 0 : index
    %c0_38 = arith.constant 0 : index
    %67 = vector.load %arg11[%c0_36, %c0_37, %c0_38] : memref<2x64x16xf32, #tpu.memory_space<vmem>>, vector<1x64x16xf32>
    %68 = vector.shape_cast %67 : vector<1x64x16xf32> to vector<64x16xf32>
    %cst_39 = arith.constant dense<0.000000e+00> : vector<16x16xf32>
    %69 = tpu.matmul %49, %68, %cst_39 {dimension_numbers = #tpu.dot_dimension_numbers<[1], [0], [0], [1], [0, 0, 1, 1], [], []>} : vector<16x64xf32>, vector<64x16xf32>, vector<16x16xf32> -> vector<16x16xf32>
    %c0_40 = arith.constant 0 : index
    %c0_41 = arith.constant 0 : index
    %c0_42 = arith.constant 0 : index
    %70 = vector.load %arg12[%c0_40, %c0_41, %c0_42] : memref<2x1x16xf32, #tpu.memory_space<vmem>>, vector<1x1x16xf32>
    %71 = vector.shape_cast %70 : vector<1x1x16xf32> to vector<1x16xf32>
    %72 = vector.broadcast %71 : vector<1x16xf32> to vector<16x16xf32>
    %73 = arith.addf %69, %72 : vector<16x16xf32>
    %74 = vector.shape_cast %59 : vector<8x16xf32> to vector<1x8x16xf32>
    %75 = vector.shape_cast %66 : vector<16x16xf32> to vector<1x16x16xf32>
    %76 = vector.shape_cast %73 : vector<16x16xf32> to vector<1x16x16xf32>
    "tpu.trace_start"() <{level = 10 : i32, message = "bmd,bnd->bmn"}> : () -> ()
    %cst_43 = arith.constant dense<0.000000e+00> : vector<1x8x16xf32>
    %77 = tpu.matmul %74, %75, %cst_43 {dimension_numbers = #tpu.dot_dimension_numbers<[2], [2], [1], [1], [0, 0, 0, 1, 1, 1], [0], [0]>} : vector<1x8x16xf32>, vector<1x16x16xf32>, vector<1x8x16xf32> -> vector<1x8x16xf32>
    "tpu.trace_stop"() : () -> ()
    %cst_44 = arith.constant 2.500000e-01 : f32
    %78 = vector.broadcast %cst_44 : f32 to vector<1x8x16xf32>
    %79 = arith.mulf %77, %78 : vector<1x8x16xf32>
    %cst_45 = arith.constant dense<0xFF800000> : vector<1x8xf32>
    %80 = vector.multi_reduction <maximumf>, %79, %cst_45 [2] : vector<1x8x16xf32> to vector<1x8xf32>
    %81 = vector.shape_cast %80 : vector<1x8xf32> to vector<1x8x1xf32>
    %82 = vector.broadcast %81 : vector<1x8x1xf32> to vector<1x8x16xf32>
    %83 = arith.subf %79, %82 : vector<1x8x16xf32>
    %84 = math.exp %83 : vector<1x8x16xf32>
    %cst_46 = arith.constant dense<0.000000e+00> : vector<1x8xf32>
    %85 = vector.multi_reduction <add>, %84, %cst_46 [2] : vector<1x8x16xf32> to vector<1x8xf32>
    %86 = vector.shape_cast %85 : vector<1x8xf32> to vector<1x8x1xf32>
    %87 = tpu.reciprocal %86 {approx = true} : vector<1x8x1xf32> -> vector<1x8x1xf32>
    %88 = vector.broadcast %87 : vector<1x8x1xf32> to vector<1x8x16xf32>
    %89 = arith.mulf %84, %88 : vector<1x8x16xf32>
    "tpu.trace_start"() <{level = 10 : i32, message = "bmn,bnd->bmd"}> : () -> ()
    %cst_47 = arith.constant dense<0.000000e+00> : vector<1x8x16xf32>
    %90 = tpu.matmul %89, %76, %cst_47 {dimension_numbers = #tpu.dot_dimension_numbers<[2], [1], [1], [2], [0, 0, 0, 1, 1, 2], [0], [0]>} : vector<1x8x16xf32>, vector<1x16x16xf32>, vector<1x8x16xf32> -> vector<1x8x16xf32>
    "tpu.trace_stop"() : () -> ()
    %91 = vector.shape_cast %90 : vector<1x8x16xf32> to vector<8x16xf32>
    %c0_48 = arith.constant 0 : index
    %c0_49 = arith.constant 0 : index
    %c0_50 = arith.constant 0 : index
    %92 = vector.load %arg13[%c0_48, %c0_49, %c0_50] : memref<2x16x32xf32, #tpu.memory_space<vmem>>, vector<1x16x32xf32>
    %93 = vector.shape_cast %92 : vector<1x16x32xf32> to vector<16x32xf32>
    %cst_51 = arith.constant dense<0.000000e+00> : vector<8x32xf32>
    %94 = tpu.matmul %91, %93, %cst_51 {dimension_numbers = #tpu.dot_dimension_numbers<[1], [0], [0], [1], [0, 0, 1, 1], [], []>} : vector<8x16xf32>, vector<16x32xf32>, vector<8x32xf32> -> vector<8x32xf32>
    %95 = arith.addf %52, %94 : vector<8x32xf32>
    %c1 = arith.constant 1 : index
    %c0_52 = arith.constant 0 : index
    %c0_53 = arith.constant 0 : index
    %96 = vector.load %arg7[%c1, %c0_52, %c0_53] : memref<2x32x16xf32, #tpu.memory_space<vmem>>, vector<1x32x16xf32>
    %97 = vector.shape_cast %96 : vector<1x32x16xf32> to vector<32x16xf32>
    %cst_54 = arith.constant dense<0.000000e+00> : vector<8x16xf32>
    %98 = tpu.matmul %25, %97, %cst_54 {dimension_numbers = #tpu.dot_dimension_numbers<[1], [0], [0], [1], [0, 0, 1, 1], [], []>} : vector<8x32xf32>, vector<32x16xf32>, vector<8x16xf32> -> vector<8x16xf32>
    %c1_55 = arith.constant 1 : index
    %c0_56 = arith.constant 0 : index
    %c0_57 = arith.constant 0 : index
    %99 = vector.load %arg8[%c1_55, %c0_56, %c0_57] : memref<2x1x16xf32, #tpu.memory_space<vmem>>, vector<1x1x16xf32>
    %100 = vector.shape_cast %99 : vector<1x1x16xf32> to vector<1x16xf32>
    %101 = vector.broadcast %100 : vector<1x16xf32> to vector<8x16xf32>
    %102 = arith.addf %98, %101 : vector<8x16xf32>
    %c1_58 = arith.constant 1 : index
    %c0_59 = arith.constant 0 : index
    %c0_60 = arith.constant 0 : index
    %103 = vector.load %arg9[%c1_58, %c0_59, %c0_60] : memref<2x64x16xf32, #tpu.memory_space<vmem>>, vector<1x64x16xf32>
    %104 = vector.shape_cast %103 : vector<1x64x16xf32> to vector<64x16xf32>
    %cst_61 = arith.constant dense<0.000000e+00> : vector<16x16xf32>
    %105 = tpu.matmul %49, %104, %cst_61 {dimension_numbers = #tpu.dot_dimension_numbers<[1], [0], [0], [1], [0, 0, 1, 1], [], []>} : vector<16x64xf32>, vector<64x16xf32>, vector<16x16xf32> -> vector<16x16xf32>
    %c1_62 = arith.constant 1 : index
    %c0_63 = arith.constant 0 : index
    %c0_64 = arith.constant 0 : index
    %106 = vector.load %arg10[%c1_62, %c0_63, %c0_64] : memref<2x1x16xf32, #tpu.memory_space<vmem>>, vector<1x1x16xf32>
    %107 = vector.shape_cast %106 : vector<1x1x16xf32> to vector<1x16xf32>
    %108 = vector.broadcast %107 : vector<1x16xf32> to vector<16x16xf32>
    %109 = arith.addf %105, %108 : vector<16x16xf32>
    %c1_65 = arith.constant 1 : index
    %c0_66 = arith.constant 0 : index
    %c0_67 = arith.constant 0 : index
    %110 = vector.load %arg11[%c1_65, %c0_66, %c0_67] : memref<2x64x16xf32, #tpu.memory_space<vmem>>, vector<1x64x16xf32>
    %111 = vector.shape_cast %110 : vector<1x64x16xf32> to vector<64x16xf32>
    %cst_68 = arith.constant dense<0.000000e+00> : vector<16x16xf32>
    %112 = tpu.matmul %49, %111, %cst_68 {dimension_numbers = #tpu.dot_dimension_numbers<[1], [0], [0], [1], [0, 0, 1, 1], [], []>} : vector<16x64xf32>, vector<64x16xf32>, vector<16x16xf32> -> vector<16x16xf32>
    %c1_69 = arith.constant 1 : index
    %c0_70 = arith.constant 0 : index
    %c0_71 = arith.constant 0 : index
    %113 = vector.load %arg12[%c1_69, %c0_70, %c0_71] : memref<2x1x16xf32, #tpu.memory_space<vmem>>, vector<1x1x16xf32>
    %114 = vector.shape_cast %113 : vector<1x1x16xf32> to vector<1x16xf32>
    %115 = vector.broadcast %114 : vector<1x16xf32> to vector<16x16xf32>
    %116 = arith.addf %112, %115 : vector<16x16xf32>
    %117 = vector.shape_cast %102 : vector<8x16xf32> to vector<1x8x16xf32>
    %118 = vector.shape_cast %109 : vector<16x16xf32> to vector<1x16x16xf32>
    %119 = vector.shape_cast %116 : vector<16x16xf32> to vector<1x16x16xf32>
    "tpu.trace_start"() <{level = 10 : i32, message = "bmd,bnd->bmn"}> : () -> ()
    %cst_72 = arith.constant dense<0.000000e+00> : vector<1x8x16xf32>
    %120 = tpu.matmul %117, %118, %cst_72 {dimension_numbers = #tpu.dot_dimension_numbers<[2], [2], [1], [1], [0, 0, 0, 1, 1, 1], [0], [0]>} : vector<1x8x16xf32>, vector<1x16x16xf32>, vector<1x8x16xf32> -> vector<1x8x16xf32>
    "tpu.trace_stop"() : () -> ()
    %cst_73 = arith.constant 2.500000e-01 : f32
    %121 = vector.broadcast %cst_73 : f32 to vector<1x8x16xf32>
    %122 = arith.mulf %120, %121 : vector<1x8x16xf32>
    %cst_74 = arith.constant dense<0xFF800000> : vector<1x8xf32>
    %123 = vector.multi_reduction <maximumf>, %122, %cst_74 [2] : vector<1x8x16xf32> to vector<1x8xf32>
    %124 = vector.shape_cast %123 : vector<1x8xf32> to vector<1x8x1xf32>
    %125 = vector.broadcast %124 : vector<1x8x1xf32> to vector<1x8x16xf32>
    %126 = arith.subf %122, %125 : vector<1x8x16xf32>
    %127 = math.exp %126 : vector<1x8x16xf32>
    %cst_75 = arith.constant dense<0.000000e+00> : vector<1x8xf32>
    %128 = vector.multi_reduction <add>, %127, %cst_75 [2] : vector<1x8x16xf32> to vector<1x8xf32>
    %129 = vector.shape_cast %128 : vector<1x8xf32> to vector<1x8x1xf32>
    %130 = tpu.reciprocal %129 {approx = true} : vector<1x8x1xf32> -> vector<1x8x1xf32>
    %131 = vector.broadcast %130 : vector<1x8x1xf32> to vector<1x8x16xf32>
    %132 = arith.mulf %127, %131 : vector<1x8x16xf32>
    "tpu.trace_start"() <{level = 10 : i32, message = "bmn,bnd->bmd"}> : () -> ()
    %cst_76 = arith.constant dense<0.000000e+00> : vector<1x8x16xf32>
    %133 = tpu.matmul %132, %119, %cst_76 {dimension_numbers = #tpu.dot_dimension_numbers<[2], [1], [1], [2], [0, 0, 0, 1, 1, 2], [0], [0]>} : vector<1x8x16xf32>, vector<1x16x16xf32>, vector<1x8x16xf32> -> vector<1x8x16xf32>
    "tpu.trace_stop"() : () -> ()
    %134 = vector.shape_cast %133 : vector<1x8x16xf32> to vector<8x16xf32>
    %c1_77 = arith.constant 1 : index
    %c0_78 = arith.constant 0 : index
    %c0_79 = arith.constant 0 : index
    %135 = vector.load %arg13[%c1_77, %c0_78, %c0_79] : memref<2x16x32xf32, #tpu.memory_space<vmem>>, vector<1x16x32xf32>
    %136 = vector.shape_cast %135 : vector<1x16x32xf32> to vector<16x32xf32>
    %cst_80 = arith.constant dense<0.000000e+00> : vector<8x32xf32>
    %137 = tpu.matmul %134, %136, %cst_80 {dimension_numbers = #tpu.dot_dimension_numbers<[1], [0], [0], [1], [0, 0, 1, 1], [], []>} : vector<8x16xf32>, vector<16x32xf32>, vector<8x32xf32> -> vector<8x32xf32>
    %138 = arith.addf %95, %137 : vector<8x32xf32>
    %c0_81 = arith.constant 0 : index
    %c0_82 = arith.constant 0 : index
    %139 = vector.load %arg15[%c0_81, %c0_82] : memref<8x32xf32, #tpu.memory_space<vmem>>, vector<8x32xf32>
    tpu.vector_store %arg15[%c0_81, %c0_82], %138 {strides = array<i32>} : memref<8x32xf32, #tpu.memory_space<vmem>>, vector<8x32xf32>,
    return
  }
  func.func @transform_0(%arg0: i32) -> (i32, i32) {
    %c0_i32 = arith.constant 0 : i32
    %c0_i32_0 = arith.constant 0 : i32
    return %arg0, %c0_i32 : i32, i32
  }
  func.func @transform_1(%arg0: i32) -> (i32, i32) {
    %c0_i32 = arith.constant 0 : i32
    %c0_i32_0 = arith.constant 0 : i32
    return %arg0, %c0_i32 : i32, i32
  }
  func.func @transform_2(%arg0: i32) -> (i32, i32) {
    %c0_i32 = arith.constant 0 : i32
    %c0_i32_0 = arith.constant 0 : i32
    %c0_i32_1 = arith.constant 0 : i32
    return %c0_i32, %c0_i32_0 : i32, i32
  }
  func.func @transform_3(%arg0: i32) -> (i32, i32) {
    %c0_i32 = arith.constant 0 : i32
    %c0_i32_0 = arith.constant 0 : i32
    %c0_i32_1 = arith.constant 0 : i32
    return %c0_i32, %c0_i32_0 : i32, i32
  }
  func.func @transform_4(%arg0: i32) -> (i32, i32) {
    %c0_i32 = arith.constant 0 : i32
    %c0_i32_0 = arith.constant 0 : i32
    %c0_i32_1 = arith.constant 0 : i32
    return %c0_i32, %c0_i32_0 : i32, i32
  }
  func.func @transform_5(%arg0: i32) -> (i32, i32) {
    %c0_i32 = arith.constant 0 : i32
    %c0_i32_0 = arith.constant 0 : i32
    %c0_i32_1 = arith.constant 0 : i32
    return %c0_i32, %c0_i32_0 : i32, i32
  }
  func.func @transform_6(%arg0: i32) -> (i32, i32, i32) {
    %c0_i32 = arith.constant 0 : i32
    %c0_i32_0 = arith.constant 0 : i32
    %c0_i32_1 = arith.constant 0 : i32
    %c0_i32_2 = arith.constant 0 : i32
    return %c0_i32, %c0_i32_0, %c0_i32_1 : i32, i32, i32
  }
  func.func @transform_7(%arg0: i32) -> (i32, i32, i32) {
    %c0_i32 = arith.constant 0 : i32
    %c0_i32_0 = arith.constant 0 : i32
    %c0_i32_1 = arith.constant 0 : i32
    %c0_i32_2 = arith.constant 0 : i32
    return %c0_i32, %c0_i32_0, %c0_i32_1 : i32, i32, i32
  }
  func.func @transform_8(%arg0: i32) -> (i32, i32, i32) {
    %c0_i32 = arith.constant 0 : i32
    %c0_i32_0 = arith.constant 0 : i32
    %c0_i32_1 = arith.constant 0 : i32
    %c0_i32_2 = arith.constant 0 : i32
    return %c0_i32, %c0_i32_0, %c0_i32_1 : i32, i32, i32
  }
  func.func @transform_9(%arg0: i32) -> (i32, i32, i32) {
    %c0_i32 = arith.constant 0 : i32
    %c0_i32_0 = arith.constant 0 : i32
    %c0_i32_1 = arith.constant 0 : i32
    %c0_i32_2 = arith.constant 0 : i32
    return %c0_i32, %c0_i32_0, %c0_i32_1 : i32, i32, i32
  }
  func.func @transform_10(%arg0: i32) -> (i32, i32, i32) {
    %c0_i32 = arith.constant 0 : i32
    %c0_i32_0 = arith.constant 0 : i32
    %c0_i32_1 = arith.constant 0 : i32
    %c0_i32_2 = arith.constant 0 : i32
    return %c0_i32, %c0_i32_0, %c0_i32_1 : i32, i32, i32
  }
  func.func @transform_11(%arg0: i32) -> (i32, i32, i32) {
    %c0_i32 = arith.constant 0 : i32
    %c0_i32_0 = arith.constant 0 : i32
    %c0_i32_1 = arith.constant 0 : i32
    %c0_i32_2 = arith.constant 0 : i32
    return %c0_i32, %c0_i32_0, %c0_i32_1 : i32, i32, i32
  }
  func.func @transform_12(%arg0: i32) -> (i32, i32, i32) {
    %c0_i32 = arith.constant 0 : i32
    %c0_i32_0 = arith.constant 0 : i32
    %c0_i32_1 = arith.constant 0 : i32
    %c0_i32_2 = arith.constant 0 : i32
    return %c0_i32, %c0_i32_0, %c0_i32_1 : i32, i32, i32
  }
  func.func @transform_13(%arg0: i32) -> (i32, i32) {
    %c0_i32 = arith.constant 0 : i32
    %c0_i32_0 = arith.constant 0 : i32
    %c0_i32_1 = arith.constant 0 : i32
    return %c0_i32, %c0_i32_0 : i32, i32
  }
  func.func @transform_14(%arg0: i32) -> (i32, i32) {
    %c0_i32 = arith.constant 0 : i32
    %c0_i32_0 = arith.constant 0 : i32
    return %arg0, %c0_i32 : i32, i32
  }
}

</mosaic_0001>

<llo_original>
// kernel: tpu_custom_call.1
$region0: #{tpu_custom_call.1}
  #allocation0 [shape = 'u32[]', space=smem, size = 0x4, offset = 0x4, fixed_abs, tag = 'smem constant byte address 0x4 - core index']
  #allocation1 [shape = 'u32[72,128]{1,0:T(1,128)}', space=vmem, size = 0x9000, scoped, tag = 'internal scratch']
  %s0 = inlined_call_operand.vmem [shape: f32[16,32], index: 0, kind: input, shape index: {}]
  %s1 = inlined_call_operand.vmem [shape: f32[32,64], index: 1, kind: input, shape index: {}]
  %s2 = inlined_call_operand.vmem [shape: f32[1,32], index: 2, kind: input, shape index: {}]
  %s3 = inlined_call_operand.vmem [shape: f32[1,32], index: 3, kind: input, shape index: {}]
  %s4 = inlined_call_operand.vmem [shape: f32[1,64], index: 4, kind: input, shape index: {}]
  %s5 = inlined_call_operand.vmem [shape: f32[1,64], index: 5, kind: input, shape index: {}]
  %s6 = inlined_call_operand.vmem [shape: f32[2,32,16], index: 6, kind: input, shape index: {}]
  %s7 = inlined_call_operand.vmem [shape: f32[2,1,16], index: 7, kind: input, shape index: {}]
  %s8 = inlined_call_operand.vmem [shape: f32[2,64,16], index: 8, kind: input, shape index: {}]
  %s9 = inlined_call_operand.vmem [shape: f32[2,1,16], index: 9, kind: input, shape index: {}]
  %s10 = inlined_call_operand.vmem [shape: f32[2,64,16], index: 10, kind: input, shape index: {}]
  %s11 = inlined_call_operand.vmem [shape: f32[2,1,16], index: 11, kind: input, shape index: {}]
  %s12 = inlined_call_operand.vmem [shape: f32[2,16,32], index: 12, kind: input, shape index: {}]
  %s13 = inlined_call_operand.vmem [shape: f32[1,32], index: 13, kind: input, shape index: {}]
  %s14 = inlined_call_operand.hbm [shape: f32[16,32], index: 14, kind: output, shape index: {}]
  %s15 = sld [smem:[#allocation0]]
  $region89: #{tpu_custom_call.1} parent=0
    _
  %s17 = ssub.s32 1, %s15
  %s18 = scalar_select 0, %s17, %s15
  $region1: #{tpu_custom_call.1} parent=0
    #allocation2 [shape = 'u8[8192]{0}', space=vmem, size = 0x2000, scoped, tag = 'output window, operand 0']
    #allocation3 [shape = 's32[2]{0}', space=sflag, size = 0x8, scoped, tag = 'scoped memory for tpu_custom_call.1']
    %19 = vsyncpa [#allocation3], 0
    %s20 = scalar_lea.sflag [#allocation3], 1
    %21 = vsyncpa %s20, 0
    loop: start=0, step=1, limit=4
    $region2: #{tpu_custom_call.1} parent=1 // loop_pre_header
      _
    $region3: #{tpu_custom_call.1} parent=1 // loop_header
      %s23 = sphi 0, %s27
      %p24 = scmp.ge.s32.totalorder %s23, 4
      %s33 = sphi 0, %s35
      %s36 = sphi 0, %s33
      %s37 = sphi 0, %s36
      %s53 = sphi 0, %s37
      %s59 = sphi 0, %s61
      %s62 = sphi 0, %s59
      %s63 = sphi 0, %s62
      %s79 = sphi 0, %s63
      %s83 = sphi 0, %s83
      %s85 = sphi 0, %s83
      %s86 = sphi 0, %s85
      %s100 = sphi 0, %s86
      %s104 = sphi 0, %s104
      %s106 = sphi 0, %s104
      %s107 = sphi 0, %s106
      %s121 = sphi 0, %s107
      %s125 = sphi 0, %s125
      %s127 = sphi 0, %s125
      %s128 = sphi 0, %s127
      %s142 = sphi 0, %s128
      %s146 = sphi 0, %s146
      %s148 = sphi 0, %s146
      %s149 = sphi 0, %s148
      %s163 = sphi 0, %s149
      %s167 = sphi 0, %s167
      %s169 = sphi 0, %s167
      %s170 = sphi 0, %s169
      %s184 = sphi 0, %s170
      %s188 = sphi 0, %s188
      %s190 = sphi 0, %s188
      %s191 = sphi 0, %s190
      %s205 = sphi 0, %s191
      %s209 = sphi 0, %s209
      %s211 = sphi 0, %s209
      %s212 = sphi 0, %s211
      %s226 = sphi 0, %s212
      %s230 = sphi 0, %s230
      %s232 = sphi 0, %s230
      %s233 = sphi 0, %s232
      %s247 = sphi 0, %s233
      %s251 = sphi 0, %s251
      %s253 = sphi 0, %s251
      %s254 = sphi 0, %s253
      %s268 = sphi 0, %s254
      %s272 = sphi 0, %s272
      %s274 = sphi 0, %s272
      %s275 = sphi 0, %s274
      %s289 = sphi 0, %s275
      %s293 = sphi 0, %s293
      %s295 = sphi 0, %s293
      %s296 = sphi 0, %s295
      %s310 = sphi 0, %s296
      %s314 = sphi 0, %s314
      %s316 = sphi 0, %s314
      %s317 = sphi 0, %s316
      %s331 = sphi 0, %s317
      %s337 = sphi 0, %s339
      %s340 = sphi 0, %s337
      %s341 = sphi 0, %s340
      %s357 = sphi 0, %s341
    $region4: #{tpu_custom_call.1} parent=1 // loop_header_branch
      %26 = sbr.rel (%p24) target = $region8
    $region5: #{tpu_custom_call.1} parent=1 // loop_body
      %s28 = ssub.s32 %s23, 1
      %s29 = ssub.s32 %s23, 2
      %s30 = sadd.s32 %s23, 1
      %s31 = ssub.s32 %s23, %s30
      %p32 = scmp.eq.s32.totalorder %s31, 0
      %s34 = sadd.s32 %s33, 1
      %s35 = scalar_select %p32, %s33, %s34
      %p38 = pneg %p32
      %p39 = scmp.eq.s32.totalorder %s23, 1
      %p40 = por %p38, %p39
      %p41 = scmp.ne.s32.totalorder %s33, %s36
      %p42 = scmp.eq.s32.totalorder %s23, 0
      %p43 = por %p41, %p42
      %p44 = scmp.ne.s32.totalorder %s33, %s36
      %p45 = scmp.eq.s32.totalorder %s28, 1
      %p46 = por %p44, %p45
      %p47 = scmp.ne.s32.totalorder %s36, %s37
      %p48 = scmp.eq.s32.totalorder %s28, 0
      %p49 = por %p47, %p48
      %p50 = scmp.ne.s32.totalorder %s36, %s37
      %p51 = scmp.eq.s32.totalorder %s29, 1
      %p52 = por %p50, %p51
      %p54 = scmp.ne.s32.totalorder %s37, %s53
      %p55 = scmp.eq.s32.totalorder %s29, 0
      %p56 = por %p54, %p55
      %s57 = ssub.s32 %s23, %s30
      %p58 = scmp.eq.s32.totalorder %s57, 0
      %s60 = sadd.s32 %s59, 1
      %s61 = scalar_select %p58, %s59, %s60
      %p64 = pneg %p58
      %p65 = scmp.eq.s32.totalorder %s23, 1
      %p66 = por %p64, %p65
      %p67 = scmp.ne.s32.totalorder %s59, %s62
      %p68 = scmp.eq.s32.totalorder %s23, 0
      %p69 = por %p67, %p68
      %p70 = scmp.ne.s32.totalorder %s59, %s62
      %p71 = scmp.eq.s32.totalorder %s28, 1
      %p72 = por %p70, %p71
      %p73 = scmp.ne.s32.totalorder %s62, %s63
      %p74 = scmp.eq.s32.totalorder %s28, 0
      %p75 = por %p73, %p74
      %p76 = scmp.ne.s32.totalorder %s62, %s63
      %p77 = scmp.eq.s32.totalorder %s29, 1
      %p78 = por %p76, %p77
      %p80 = scmp.ne.s32.totalorder %s63, %s79
      %p81 = scmp.eq.s32.totalorder %s29, 0
      %p82 = por %p80, %p81
      %s84 = sadd.s32 %s83, 1
      %p87 = scmp.eq.s32.totalorder %s23, 1
      %p88 = scmp.ne.s32.totalorder %s83, %s85
      %p89 = scmp.eq.s32.totalorder %s23, 0
      %p90 = por %p88, %p89
      %p91 = scmp.ne.s32.totalorder %s83, %s85
      %p92 = scmp.eq.s32.totalorder %s28, 1
      %p93 = por %p91, %p92
      %p94 = scmp.ne.s32.totalorder %s85, %s86
      %p95 = scmp.eq.s32.totalorder %s28, 0
      %p96 = por %p94, %p95
      %p97 = scmp.ne.s32.totalorder %s85, %s86
      %p98 = scmp.eq.s32.totalorder %s29, 1
      %p99 = por %p97, %p98
      %p101 = scmp.ne.s32.totalorder %s86, %s100
      %p102 = scmp.eq.s32.totalorder %s29, 0
      %p103 = por %p101, %p102
      %s105 = sadd.s32 %s104, 1
      %p108 = scmp.eq.s32.totalorder %s23, 1
      %p109 = scmp.ne.s32.totalorder %s104, %s106
      %p110 = scmp.eq.s32.totalorder %s23, 0
      %p111 = por %p109, %p110
      %p112 = scmp.ne.s32.totalorder %s104, %s106
      %p113 = scmp.eq.s32.totalorder %s28, 1
      %p114 = por %p112, %p113
      %p115 = scmp.ne.s32.totalorder %s106, %s107
      %p116 = scmp.eq.s32.totalorder %s28, 0
      %p117 = por %p115, %p116
      %p118 = scmp.ne.s32.totalorder %s106, %s107
      %p119 = scmp.eq.s32.totalorder %s29, 1
      %p120 = por %p118, %p119
      %p122 = scmp.ne.s32.totalorder %s107, %s121
      %p123 = scmp.eq.s32.totalorder %s29, 0
      %p124 = por %p122, %p123
      %s126 = sadd.s32 %s125, 1
      %p129 = scmp.eq.s32.totalorder %s23, 1
      %p130 = scmp.ne.s32.totalorder %s125, %s127
      %p131 = scmp.eq.s32.totalorder %s23, 0
      %p132 = por %p130, %p131
      %p133 = scmp.ne.s32.totalorder %s125, %s127
      %p134 = scmp.eq.s32.totalorder %s28, 1
      %p135 = por %p133, %p134
      %p136 = scmp.ne.s32.totalorder %s127, %s128
      %p137 = scmp.eq.s32.totalorder %s28, 0
      %p138 = por %p136, %p137
      %p139 = scmp.ne.s32.totalorder %s127, %s128
      %p140 = scmp.eq.s32.totalorder %s29, 1
      %p141 = por %p139, %p140
      %p143 = scmp.ne.s32.totalorder %s128, %s142
      %p144 = scmp.eq.s32.totalorder %s29, 0
      %p145 = por %p143, %p144
      %s147 = sadd.s32 %s146, 1
      %p150 = scmp.eq.s32.totalorder %s23, 1
      %p151 = scmp.ne.s32.totalorder %s146, %s148
      %p152 = scmp.eq.s32.totalorder %s23, 0
      %p153 = por %p151, %p152
      %p154 = scmp.ne.s32.totalorder %s146, %s148
      %p155 = scmp.eq.s32.totalorder %s28, 1
      %p156 = por %p154, %p155
      %p157 = scmp.ne.s32.totalorder %s148, %s149
      %p158 = scmp.eq.s32.totalorder %s28, 0
      %p159 = por %p157, %p158
      %p160 = scmp.ne.s32.totalorder %s148, %s149
      %p161 = scmp.eq.s32.totalorder %s29, 1
      %p162 = por %p160, %p161
      %p164 = scmp.ne.s32.totalorder %s149, %s163
      %p165 = scmp.eq.s32.totalorder %s29, 0
      %p166 = por %p164, %p165
      %s168 = sadd.s32 %s167, 1
      %p171 = scmp.eq.s32.totalorder %s23, 1
      %p172 = scmp.ne.s32.totalorder %s167, %s169
      %p173 = scmp.eq.s32.totalorder %s23, 0
      %p174 = por %p172, %p173
      %p175 = scmp.ne.s32.totalorder %s167, %s169
      %p176 = scmp.eq.s32.totalorder %s28, 1
      %p177 = por %p175, %p176
      %p178 = scmp.ne.s32.totalorder %s169, %s170
      %p179 = scmp.eq.s32.totalorder %s28, 0
      %p180 = por %p178, %p179
      %p181 = scmp.ne.s32.totalorder %s169, %s170
      %p182 = scmp.eq.s32.totalorder %s29, 1
      %p183 = por %p181, %p182
      %p185 = scmp.ne.s32.totalorder %s170, %s184
      %p186 = scmp.eq.s32.totalorder %s29, 0
      %p187 = por %p185, %p186
      %s189 = sadd.s32 %s188, 1
      %p192 = scmp.eq.s32.totalorder %s23, 1
      %p193 = scmp.ne.s32.totalorder %s188, %s190
      %p194 = scmp.eq.s32.totalorder %s23, 0
      %p195 = por %p193, %p194
      %p196 = scmp.ne.s32.totalorder %s188, %s190
      %p197 = scmp.eq.s32.totalorder %s28, 1
      %p198 = por %p196, %p197
      %p199 = scmp.ne.s32.totalorder %s190, %s191
      %p200 = scmp.eq.s32.totalorder %s28, 0
      %p201 = por %p199, %p200
      %p202 = scmp.ne.s32.totalorder %s190, %s191
      %p203 = scmp.eq.s32.totalorder %s29, 1
      %p204 = por %p202, %p203
      %p206 = scmp.ne.s32.totalorder %s191, %s205
      %p207 = scmp.eq.s32.totalorder %s29, 0
      %p208 = por %p206, %p207
      %s210 = sadd.s32 %s209, 1
      %p213 = scmp.eq.s32.totalorder %s23, 1
      %p214 = scmp.ne.s32.totalorder %s209, %s211
      %p215 = scmp.eq.s32.totalorder %s23, 0
      %p216 = por %p214, %p215
      %p217 = scmp.ne.s32.totalorder %s209, %s211
      %p218 = scmp.eq.s32.totalorder %s28, 1
      %p219 = por %p217, %p218
      %p220 = scmp.ne.s32.totalorder %s211, %s212
      %p221 = scmp.eq.s32.totalorder %s28, 0
      %p222 = por %p220, %p221
      %p223 = scmp.ne.s32.totalorder %s211, %s212
      %p224 = scmp.eq.s32.totalorder %s29, 1
      %p225 = por %p223, %p224
      %p227 = scmp.ne.s32.totalorder %s212, %s226
      %p228 = scmp.eq.s32.totalorder %s29, 0
      %p229 = por %p227, %p228
      %s231 = sadd.s32 %s230, 1
      %p234 = scmp.eq.s32.totalorder %s23, 1
      %p235 = scmp.ne.s32.totalorder %s230, %s232
      %p236 = scmp.eq.s32.totalorder %s23, 0
      %p237 = por %p235, %p236
      %p238 = scmp.ne.s32.totalorder %s230, %s232
      %p239 = scmp.eq.s32.totalorder %s28, 1
      %p240 = por %p238, %p239
      %p241 = scmp.ne.s32.totalorder %s232, %s233
      %p242 = scmp.eq.s32.totalorder %s28, 0
      %p243 = por %p241, %p242
      %p244 = scmp.ne.s32.totalorder %s232, %s233
      %p245 = scmp.eq.s32.totalorder %s29, 1
      %p246 = por %p244, %p245
      %p248 = scmp.ne.s32.totalorder %s233, %s247
      %p249 = scmp.eq.s32.totalorder %s29, 0
      %p250 = por %p248, %p249
      %s252 = sadd.s32 %s251, 1
      %p255 = scmp.eq.s32.totalorder %s23, 1
      %p256 = scmp.ne.s32.totalorder %s251, %s253
      %p257 = scmp.eq.s32.totalorder %s23, 0
      %p258 = por %p256, %p257
      %p259 = scmp.ne.s32.totalorder %s251, %s253
      %p260 = scmp.eq.s32.totalorder %s28, 1
      %p261 = por %p259, %p260
      %p262 = scmp.ne.s32.totalorder %s253, %s254
      %p263 = scmp.eq.s32.totalorder %s28, 0
      %p264 = por %p262, %p263
      %p265 = scmp.ne.s32.totalorder %s253, %s254
      %p266 = scmp.eq.s32.totalorder %s29, 1
      %p267 = por %p265, %p266
      %p269 = scmp.ne.s32.totalorder %s254, %s268
      %p270 = scmp.eq.s32.totalorder %s29, 0
      %p271 = por %p269, %p270
      %s273 = sadd.s32 %s272, 1
      %p276 = scmp.eq.s32.totalorder %s23, 1
      %p277 = scmp.ne.s32.totalorder %s272, %s274
      %p278 = scmp.eq.s32.totalorder %s23, 0
      %p279 = por %p277, %p278
      %p280 = scmp.ne.s32.totalorder %s272, %s274
      %p281 = scmp.eq.s32.totalorder %s28, 1
      %p282 = por %p280, %p281
      %p283 = scmp.ne.s32.totalorder %s274, %s275
      %p284 = scmp.eq.s32.totalorder %s28, 0
      %p285 = por %p283, %p284
      %p286 = scmp.ne.s32.totalorder %s274, %s275
      %p287 = scmp.eq.s32.totalorder %s29, 1
      %p288 = por %p286, %p287
      %p290 = scmp.ne.s32.totalorder %s275, %s289
      %p291 = scmp.eq.s32.totalorder %s29, 0
      %p292 = por %p290, %p291
      %s294 = sadd.s32 %s293, 1
      %p297 = scmp.eq.s32.totalorder %s23, 1
      %p298 = scmp.ne.s32.totalorder %s293, %s295
      %p299 = scmp.eq.s32.totalorder %s23, 0
      %p300 = por %p298, %p299
      %p301 = scmp.ne.s32.totalorder %s293, %s295
      %p302 = scmp.eq.s32.totalorder %s28, 1
      %p303 = por %p301, %p302
      %p304 = scmp.ne.s32.totalorder %s295, %s296
      %p305 = scmp.eq.s32.totalorder %s28, 0
      %p306 = por %p304, %p305
      %p307 = scmp.ne.s32.totalorder %s295, %s296
      %p308 = scmp.eq.s32.totalorder %s29, 1
      %p309 = por %p307, %p308
      %p311 = scmp.ne.s32.totalorder %s296, %s310
      %p312 = scmp.eq.s32.totalorder %s29, 0
      %p313 = por %p311, %p312
      %s315 = sadd.s32 %s314, 1
      %p318 = scmp.eq.s32.totalorder %s23, 1
      %p319 = scmp.ne.s32.totalorder %s314, %s316
      %p320 = scmp.eq.s32.totalorder %s23, 0
      %p321 = por %p319, %p320
      %p322 = scmp.ne.s32.totalorder %s314, %s316
      %p323 = scmp.eq.s32.totalorder %s28, 1
      %p324 = por %p322, %p323
      %p325 = scmp.ne.s32.totalorder %s316, %s317
      %p326 = scmp.eq.s32.totalorder %s28, 0
      %p327 = por %p325, %p326
      %p328 = scmp.ne.s32.totalorder %s316, %s317
      %p329 = scmp.eq.s32.totalorder %s29, 1
      %p330 = por %p328, %p329
      %p332 = scmp.ne.s32.totalorder %s317, %s331
      %p333 = scmp.eq.s32.totalorder %s29, 0
      %p334 = por %p332, %p333
      %s335 = ssub.s32 %s23, %s30
      %p336 = scmp.eq.s32.totalorder %s335, 0
      %s338 = sadd.s32 %s337, 1
      %s339 = scalar_select %p336, %s337, %s338
      %p342 = pneg %p336
      %p343 = scmp.eq.s32.totalorder %s23, 1
      %p344 = por %p342, %p343
      %p345 = scmp.ne.s32.totalorder %s337, %s340
      %p346 = scmp.eq.s32.totalorder %s23, 0
      %p347 = por %p345, %p346
      %p348 = scmp.ne.s32.totalorder %s337, %s340
      %p349 = scmp.eq.s32.totalorder %s28, 1
      %p350 = por %p348, %p349
      %p351 = scmp.ne.s32.totalorder %s340, %s341
      %p352 = scmp.eq.s32.totalorder %s28, 0
      %p353 = por %p351, %p352
      %p354 = scmp.ne.s32.totalorder %s340, %s341
      %p355 = scmp.eq.s32.totalorder %s29, 1
      %p356 = por %p354, %p355
      %p358 = scmp.ne.s32.totalorder %s341, %s357
      %p359 = scmp.eq.s32.totalorder %s29, 0
      %p360 = por %p358, %p359
      %p361 = scmp.le.s32.totalorder 1, %s23
      %p362 = scmp.lt.s32.totalorder %s23, 3
      %p363 = pnand %p361, %p362
      %p364 = pneg %p363
      // Predicated region
      $region9: #{tpu_custom_call.1} parent=5 // pred_check
        _
      $region10: #{tpu_custom_call.1} parent=5 // pred_check_branch
        %366 = sbr.rel (%p363) target = $region12
      $region11: #{tpu_custom_call.1} parent=5 // pred_region
        %s367 = ssub.s32 %s23, 1
        // Predicated region
        $region13: #{tpu_custom_call.1} parent=11 // pred_check
          %p368 = pneg %p96
        $region14: #{tpu_custom_call.1} parent=11 // pred_check_branch
          %370 = sbr.rel (%p368) target = $region16
        $region15: #{tpu_custom_call.1} parent=11 // pred_region
          _
        $region16: #{tpu_custom_call.1} parent=11 // pred_fallthru
          _
        // Predicated region
        $region17: #{tpu_custom_call.1} parent=11 // pred_check
          %p371 = pneg %p117
        $region18: #{tpu_custom_call.1} parent=11 // pred_check_branch
          %373 = sbr.rel (%p371) target = $region20
        $region19: #{tpu_custom_call.1} parent=11 // pred_region
          _
        $region20: #{tpu_custom_call.1} parent=11 // pred_fallthru
          _
        // Predicated region
        $region21: #{tpu_custom_call.1} parent=11 // pred_check
          %p374 = pneg %p138
        $region22: #{tpu_custom_call.1} parent=11 // pred_check_branch
          %376 = sbr.rel (%p374) target = $region24
        $region23: #{tpu_custom_call.1} parent=11 // pred_region
          _
        $region24: #{tpu_custom_call.1} parent=11 // pred_fallthru
          _
        // Predicated region
        $region25: #{tpu_custom_call.1} parent=11 // pred_check
          %p377 = pneg %p159
        $region26: #{tpu_custom_call.1} parent=11 // pred_check_branch
          %379 = sbr.rel (%p377) target = $region28
        $region27: #{tpu_custom_call.1} parent=11 // pred_region
          _
        $region28: #{tpu_custom_call.1} parent=11 // pred_fallthru
          _
        // Predicated region
        $region29: #{tpu_custom_call.1} parent=11 // pred_check
          %p380 = pneg %p180
        $region30: #{tpu_custom_call.1} parent=11 // pred_check_branch
          %382 = sbr.rel (%p380) target = $region32
        $region31: #{tpu_custom_call.1} parent=11 // pred_region
          _
        $region32: #{tpu_custom_call.1} parent=11 // pred_fallthru
          _
        // Predicated region
        $region33: #{tpu_custom_call.1} parent=11 // pred_check
          %p383 = pneg %p201
        $region34: #{tpu_custom_call.1} parent=11 // pred_check_branch
          %385 = sbr.rel (%p383) target = $region36
        $region35: #{tpu_custom_call.1} parent=11 // pred_region
          _
        $region36: #{tpu_custom_call.1} parent=11 // pred_fallthru
          _
        // Predicated region
        $region37: #{tpu_custom_call.1} parent=11 // pred_check
          %p386 = pneg %p222
        $region38: #{tpu_custom_call.1} parent=11 // pred_check_branch
          %388 = sbr.rel (%p386) target = $region40
        $region39: #{tpu_custom_call.1} parent=11 // pred_region
          _
        $region40: #{tpu_custom_call.1} parent=11 // pred_fallthru
          _
        // Predicated region
        $region41: #{tpu_custom_call.1} parent=11 // pred_check
          %p389 = pneg %p243
        $region42: #{tpu_custom_call.1} parent=11 // pred_check_branch
          %391 = sbr.rel (%p389) target = $region44
        $region43: #{tpu_custom_call.1} parent=11 // pred_region
          _
        $region44: #{tpu_custom_call.1} parent=11 // pred_fallthru
          _
        // Predicated region
        $region45: #{tpu_custom_call.1} parent=11 // pred_check
          %p392 = pneg %p264
        $region46: #{tpu_custom_call.1} parent=11 // pred_check_branch
          %394 = sbr.rel (%p392) target = $region48
        $region47: #{tpu_custom_call.1} parent=11 // pred_region
          _
        $region48: #{tpu_custom_call.1} parent=11 // pred_fallthru
          _
        // Predicated region
        $region49: #{tpu_custom_call.1} parent=11 // pred_check
          %p395 = pneg %p285
        $region50: #{tpu_custom_call.1} parent=11 // pred_check_branch
          %397 = sbr.rel (%p395) target = $region52
        $region51: #{tpu_custom_call.1} parent=11 // pred_region
          _
        $region52: #{tpu_custom_call.1} parent=11 // pred_fallthru
          _
        // Predicated region
        $region53: #{tpu_custom_call.1} parent=11 // pred_check
          %p398 = pneg %p306
        $region54: #{tpu_custom_call.1} parent=11 // pred_check_branch
          %400 = sbr.rel (%p398) target = $region56
        $region55: #{tpu_custom_call.1} parent=11 // pred_region
          _
        $region56: #{tpu_custom_call.1} parent=11 // pred_fallthru
          _
        // Predicated region
        $region57: #{tpu_custom_call.1} parent=11 // pred_check
          %p401 = pneg %p327
        $region58: #{tpu_custom_call.1} parent=11 // pred_check_branch
          %403 = sbr.rel (%p401) target = $region60
        $region59: #{tpu_custom_call.1} parent=11 // pred_region
          _
        $region60: #{tpu_custom_call.1} parent=11 // pred_fallthru
          _
      $region12: #{tpu_custom_call.1} parent=5 // pred_fallthru
        _
      %p404 = scmp.lt.s32.totalorder %s23, 2
      // Predicated region
      $region61: #{tpu_custom_call.1} parent=5 // pred_check
        %p405 = pneg %p404
      $region62: #{tpu_custom_call.1} parent=5 // pred_check_branch
        %407 = sbr.rel (%p405) target = $region64
      $region63: #{tpu_custom_call.1} parent=5 // pred_region
        // Predicated region
        $region65: #{tpu_custom_call.1} parent=63 // pred_check
          %p408 = pneg %p43
        $region66: #{tpu_custom_call.1} parent=63 // pred_check_branch
          %410 = sbr.rel (%p408) target = $region68
        $region67: #{tpu_custom_call.1} parent=63 // pred_region
          %p411 = scmp.lt.s32.totalorder %s23, 1
          %s412 = scalar_select %p411, %s23, 1
          %s413 = smul.addr %s412, 8
          %s414 = scalar_lea.vmem %s0, %s413
        $region68: #{tpu_custom_call.1} parent=63 // pred_fallthru
          _
        // Predicated region
        $region69: #{tpu_custom_call.1} parent=63 // pred_check
          %p415 = pneg %p69
        $region70: #{tpu_custom_call.1} parent=63 // pred_check_branch
          %417 = sbr.rel (%p415) target = $region72
        $region71: #{tpu_custom_call.1} parent=63 // pred_region
          %s418 = smul.u32 2, %s23
          %p419 = scmp.lt.s32.totalorder %s418, 3
          %s420 = scalar_select %p419, %s418, 3
          %s421 = smul.addr %s420, 8
          %s422 = scalar_lea.vmem %s1, %s421
          %s423 = smul.u32 2, %s23
        $region72: #{tpu_custom_call.1} parent=63 // pred_fallthru
          _
      $region64: #{tpu_custom_call.1} parent=5 // pred_fallthru
        _
      %p424 = scmp.le.s32.totalorder 1, %s23
      %p425 = scmp.lt.s32.totalorder %s23, 3
      %p426 = pnand %p424, %p425
      %p427 = pneg %p426
      // Predicated region
      $region73: #{tpu_custom_call.1} parent=5 // pred_check
        _
      $region74: #{tpu_custom_call.1} parent=5 // pred_check_branch
        %429 = sbr.rel (%p426) target = $region76
      $region75: #{tpu_custom_call.1} parent=5 // pred_region
        %s430 = ssub.s32 %s23, 1
        %p431 = scmp.lt.s32.totalorder %s28, 1
        %s432 = scalar_select %p431, %s28, 1
        %s433 = smul.addr %s432, 8
        %s434 = scalar_lea.vmem %s0, %s433
        %p435 = pneg %p49
        %p436 = pneg %p46
        %s437 = smul.u32 2, %s28
        %p438 = scmp.lt.s32.totalorder %s437, 3
        %s439 = scalar_select %p438, %s437, 3
        %s440 = smul.addr %s439, 8
        %s441 = scalar_lea.vmem %s1, %s440
        %p442 = pneg %p75
        %p443 = pneg %p72
        %p444 = pneg %p96
        %p445 = pneg %p93
        %p446 = pneg %p117
        %p447 = pneg %p114
        %p448 = pneg %p138
        %p449 = pneg %p135
        %p450 = pneg %p159
        %p451 = pneg %p156
        %p452 = pneg %p180
        %p453 = pneg %p177
        %p454 = pneg %p201
        %p455 = pneg %p198
        %p456 = pneg %p222
        %p457 = pneg %p219
        %p458 = pneg %p243
        %p459 = pneg %p240
        %p460 = pneg %p264
        %p461 = pneg %p261
        %p462 = pneg %p285
        %p463 = pneg %p282
        %p464 = pneg %p306
        %p465 = pneg %p303
        %p466 = pneg %p327
        %p467 = pneg %p324
        %p468 = pneg %p353
        %p469 = pneg %p350
        %s470 = sand.u32 %s340, 1
        %s471 = scalar_lea.sflag [#allocation3], %s470
        %s472 = sand.u32 %s340, 1
        %s473 = smul.addr %s472, 8
        %s474 = scalar_lea.vmem [#allocation2], %s473
        %p475 = scmp.lt.s32.totalorder %s28, 1
        %s476 = scalar_select %p475, %s28, 1
        %s477 = smul.addr %s476, 8
        %s478 = scalar_lea.vmem %s0, %s477
        %s479 = smul.u32 2, %s28
        %p480 = scmp.lt.s32.totalorder %s479, 3
        %s481 = scalar_select %p480, %s479, 3
        %s482 = smul.addr %s481, 8
        %s483 = scalar_lea.vmem %s1, %s482
        %s484 = smul.u32 2, %s28
        %v485 = vld [vmem:[%s478] sm:$0xff]
        %v486 = vld [vmem:[%s483] sm:$0xff]
        %v487 = vld [vmem:[%s483 + $0x8] sm:$0xff]
        %v488 = vld [vmem:[%s2] sm:$0x1]
        %v489 = vld [vmem:[%s3] sm:$0x1]
        %vm490 = vcmask 261120
        %v491 = vsel %vm490, %v485, 0.0
        %492 = vadd.xlane.f32.xlu0 %v491
        %v493 = vpop.xlane.xlu0 %492
        %v494 = vrcp.pop 32.0
        %v495 = vmul.f32 32.0, %v494
        %v496 = vsub.f32 1.0, %v495
        %v497 = vmul.f32 %v494, %v496
        %v498 = vadd.f32 %v494, %v497
        %vm499 = vweird.f32 %v494
        %v500 = vsel %vm499, %v494, %v498
        %v501 = vmul.f32 %v493, %v500
        %v502 = vmul.f32 %v485, %v485
        %v503 = vsel %vm490, %v502, 0.0
        %504 = vadd.xlane.f32.xlu0 %v503
        %v505 = vpop.xlane.xlu0 %504
        %v506 = vmul.f32 %v505, %v500
        %v507 = vmul.f32 %v501, %v501
        %v508 = vsub.f32 %v506, %v507
        %v509 = vsub.f32 %v485, %v501
        %v510 = vadd.f32 %v508, 1e-05
        %v511 = vrsqrt.pop %v510
        %v512 = vmul.f32 %v511, %v510
        %v513 = vmul.f32 %v512, %v511
        %v514 = vmul.f32 0.5, %v513
        %v515 = vsub.f32 1.5, %v514
        %v516 = vmul.f32 %v511, %v515
        %vm517 = vweird.f32 %v510
        %vm518 = vweird.f32 %v511
        %vm519 = vmor %vm517, %vm518
        %v520 = vsel %vm519, %v511, %v516
        %v521 = vmul.f32 %v509, %v520
        %v523 = vperm.slane %v488, 0
        %v525 = vmul.f32 %v521, %v523
        %v527 = vperm.slane %v489, 0
        %v529 = vadd.f32 %v525, %v527
        %v530 = vld [vmem:[%s4] sm:$0x1]
        %v531 = vld [vmem:[%s5] sm:$0x1]
        %vm532 = vcmask 523264
        %v533 = vsel %vm532, %v486, 0.0
        %534 = vadd.xlane.f32.xlu0 %v533
        %v535 = vpop.xlane.xlu0 %534
        %v536 = vsel %vm532, %v487, 0.0
        %537 = vadd.xlane.f32.xlu0 %v536
        %v538 = vpop.xlane.xlu0 %537
        %v539 = vrcp.pop 64.0
        %v540 = vmul.f32 64.0, %v539
        %v541 = vsub.f32 1.0, %v540
        %v542 = vmul.f32 %v539, %v541
        %v543 = vadd.f32 %v539, %v542
        %vm544 = vweird.f32 %v539
        %v545 = vsel %vm544, %v539, %v543
        %v546 = vmul.f32 %v535, %v545
        %v547 = vmul.f32 %v538, %v545
        %v548 = vmul.f32 %v486, %v486
        %v549 = vmul.f32 %v487, %v487
        %v550 = vsel %vm532, %v548, 0.0
        %551 = vadd.xlane.f32.xlu0 %v550
        %v552 = vpop.xlane.xlu0 %551
        %v553 = vsel %vm532, %v549, 0.0
        %554 = vadd.xlane.f32.xlu0 %v553
        %v555 = vpop.xlane.xlu0 %554
        %v556 = vmul.f32 %v552, %v545
        %v557 = vmul.f32 %v555, %v545
        %v558 = vmul.f32 %v546, %v546
        %v559 = vmul.f32 %v547, %v547
        %v560 = vsub.f32 %v556, %v558
        %v561 = vsub.f32 %v557, %v559
        %v562 = vsub.f32 %v486, %v546
        %v563 = vsub.f32 %v487, %v547
        %v564 = vadd.f32 %v560, 1e-05
        %v565 = vadd.f32 %v561, 1e-05
        %v566 = vrsqrt.pop %v564
        %v567 = vmul.f32 %v566, %v564
        %v568 = vmul.f32 %v567, %v566
        %v569 = vmul.f32 0.5, %v568
        %v570 = vsub.f32 1.5, %v569
        %v571 = vmul.f32 %v566, %v570
        %vm572 = vweird.f32 %v564
        %vm573 = vweird.f32 %v566
        %vm574 = vmor %vm572, %vm573
        %v575 = vsel %vm574, %v566, %v571
        %v576 = vrsqrt.pop %v565
        %v577 = vmul.f32 %v576, %v565
        %v578 = vmul.f32 %v577, %v576
        %v579 = vmul.f32 0.5, %v578
        %v580 = vsub.f32 1.5, %v579
        %v581 = vmul.f32 %v576, %v580
        %vm582 = vweird.f32 %v565
        %vm583 = vweird.f32 %v576
        %vm584 = vmor %vm582, %vm583
        %v585 = vsel %vm584, %v576, %v581
        %v586 = vmul.f32 %v562, %v575
        %v587 = vmul.f32 %v563, %v585
        %v589 = vperm.slane %v530, 0
        %v591 = vmul.f32 %v586, %v589
        %v592 = vmul.f32 %v587, %v589
        %v594 = vperm.slane %v531, 0
        %v596 = vadd.f32 %v591, %v594
        %v597 = vadd.f32 %v592, %v594
        %v598 = vld [vmem:[%s13] sm:$0x1]
        %v600 = vperm.slane %v598, 0
        %v602 = vadd.f32 %v485, %v600
        %v603 = vld [vmem:[%s6] sm:$0xff]
        %v604 = vld [vmem:[%s6 + $0x8] sm:$0xff]
        %v605 = vld [vmem:[%s6 + $0x10] sm:$0xff]
        %v606 = vld [vmem:[%s6 + $0x18] sm:$0xff]
        %v607 = vld [vmem:[%s7] sm:$0x1]
        %v609 = vperm.slane %v607, 0
        %v612 = vsel %vm490, %v529, 0
        %614 = vmatpush.msra.mxu0 0.0
        %615 = vmatpush.msra.mxu0 0.0
        %616 = vmatpush.msra.mxu0 0.0
        %617 = vmatpush.msra.mxu0 0.0
        %618 = vmatpush.msra.mxu0 0.0
        %619 = vmatpush.msra.mxu0 0.0
        %620 = vmatpush.msra.mxu0 0.0
        %621 = vmatpush.msra.mxu0 0.0
        %622 = vmatpush.msra.mxu0 0.0
        %623 = vmatpush.msra.mxu0 0.0
        %624 = vmatpush.msra.mxu0 0.0
        %625 = vmatpush.msra.mxu0 0.0
        %626 = vmatpush.msra.mxu0 %v606
        %627 = vmatpush.msra.mxu0 %v605
        %628 = vmatpush.msra.mxu0 %v604
        %629 = vmatpush.msra.mxu0 %v603
        %630 = vmatmul.f32.gmra.mxu0 %v612
        %v631 = vpop.f32.mrf.mxu0
        %v632 = vadd.f32 %v609, %v631
        %633 = vdwg.mxu0
        %v634 = vld [vmem:[%s8] sm:$0xff]
        %v635 = vld [vmem:[%s8 + $0x8] sm:$0xff]
        %v636 = vld [vmem:[%s8 + $0x10] sm:$0xff]
        %v637 = vld [vmem:[%s8 + $0x18] sm:$0xff]
        %v638 = vld [vmem:[%s8 + $0x20] sm:$0xff]
        %v639 = vld [vmem:[%s8 + $0x28] sm:$0xff]
        %v640 = vld [vmem:[%s8 + $0x30] sm:$0xff]
        %v641 = vld [vmem:[%s8 + $0x38] sm:$0xff]
        %v642 = vld [vmem:[%s9] sm:$0x1]
        %v644 = vperm.slane %v642, 0
        %v647 = vsel %vm532, %v596, 0
        %v650 = vsel %vm532, %v597, 0
        %652 = vmatpush.msra.mxu0 0.0
        %653 = vmatpush.msra.mxu0 0.0
        %654 = vmatpush.msra.mxu0 0.0
        %655 = vmatpush.msra.mxu0 0.0
        %656 = vmatpush.msra.mxu0 0.0
        %657 = vmatpush.msra.mxu0 0.0
        %658 = vmatpush.msra.mxu0 0.0
        %659 = vmatpush.msra.mxu0 0.0
        %660 = vmatpush.msra.mxu0 %v641
        %661 = vmatpush.msra.mxu0 %v640
        %662 = vmatpush.msra.mxu0 %v639
        %663 = vmatpush.msra.mxu0 %v638
        %664 = vmatpush.msra.mxu0 %v637
        %665 = vmatpush.msra.mxu0 %v636
        %666 = vmatpush.msra.mxu0 %v635
        %667 = vmatpush.msra.mxu0 %v634
        %668 = vmatmul.f32.gmra.mxu0 %v647
        %v669 = vpop.f32.mrf.mxu0
        %v670 = vadd.f32 %v644, %v669
        %671 = vmatmul.f32.gmra.mxu0 %v650
        %v672 = vpop.f32.mrf.mxu0
        %v673 = vadd.f32 %v644, %v672
        %674 = vdwg.mxu0
        %v675 = vld [vmem:[%s10] sm:$0xff]
        %v676 = vld [vmem:[%s10 + $0x8] sm:$0xff]
        %v677 = vld [vmem:[%s10 + $0x10] sm:$0xff]
        %v678 = vld [vmem:[%s10 + $0x18] sm:$0xff]
        %v679 = vld [vmem:[%s10 + $0x20] sm:$0xff]
        %v680 = vld [vmem:[%s10 + $0x28] sm:$0xff]
        %v681 = vld [vmem:[%s10 + $0x30] sm:$0xff]
        %v682 = vld [vmem:[%s10 + $0x38] sm:$0xff]
        %v683 = vld [vmem:[%s11] sm:$0x1]
        %v685 = vperm.slane %v683, 0
        %687 = vmatpush.msra.mxu0 0.0
        %688 = vmatpush.msra.mxu0 0.0
        %689 = vmatpush.msra.mxu0 0.0
        %690 = vmatpush.msra.mxu0 0.0
        %691 = vmatpush.msra.mxu0 0.0
        %692 = vmatpush.msra.mxu0 0.0
        %693 = vmatpush.msra.mxu0 0.0
        %694 = vmatpush.msra.mxu0 0.0
        %695 = vmatpush.msra.mxu0 %v682
        %696 = vmatpush.msra.mxu0 %v681
        %697 = vmatpush.msra.mxu0 %v680
        %698 = vmatpush.msra.mxu0 %v679
        %699 = vmatpush.msra.mxu0 %v678
        %700 = vmatpush.msra.mxu0 %v677
        %701 = vmatpush.msra.mxu0 %v676
        %702 = vmatpush.msra.mxu0 %v675
        %703 = vmatmul.f32.gmra.mxu0 %v647
        %v704 = vpop.f32.mrf.mxu0
        %v705 = vadd.f32 %v685, %v704
        %706 = vmatmul.f32.gmra.mxu0 %v650
        %v707 = vpop.f32.mrf.mxu0
        %v708 = vadd.f32 %v685, %v707
        %709 = vdwg.mxu0
        %vm710 = vcmask 130048
        %v712 = vsel %vm710, %v632, 0
        %v715 = vsel %vm710, %v670, 0
        %v718 = vsel %vm710, %v673, 0
        %720 = vmatpush.xpose.msra.mxu0 0.0
        %721 = vmatpush.xpose.msra.mxu0 0.0
        %722 = vmatpush.xpose.msra.mxu0 0.0
        %723 = vmatpush.xpose.msra.mxu0 0.0
        %724 = vmatpush.xpose.msra.mxu0 0.0
        %725 = vmatpush.xpose.msra.mxu0 0.0
        %726 = vmatpush.xpose.msra.mxu0 0.0
        %727 = vmatpush.xpose.msra.mxu0 0.0
        %728 = vmatpush.xpose.msra.mxu0 0.0
        %729 = vmatpush.xpose.msra.mxu0 0.0
        %730 = vmatpush.xpose.msra.mxu0 0.0
        %731 = vmatpush.xpose.msra.mxu0 0.0
        %732 = vmatpush.xpose.msra.mxu0 0.0
        %733 = vmatpush.xpose.msra.mxu0 0.0
        %734 = vmatpush.xpose.msra.mxu0 %v718
        %735 = vmatpush.xpose.msra.mxu0 %v715
        %736 = vmatmul.f32.gmra.mxu0 %v712
        %v737 = vpop.f32.mrf.mxu0
        %v738 = vadd.f32 0.0, %v737
        %739 = vdwg.mxu0
        %v740 = vmul.f32 %v738, 0.25
        %v741 = vsel %vm710, %v740, -inf
        %742 = vmax.xlane.f32.xlu0 %v741
        %v743 = vpop.xlane.xlu0 %742
        %v744 = vsub.f32 %v740, %v743
        %v745 = vmul.f32 %v744, 1.442695
        %v746 = vpow.pop %v745
        %v747 = vsel %vm710, %v746, 0.0
        %748 = vadd.xlane.f32.xlu0 %v747
        %v749 = vpop.xlane.xlu0 %748
        %v750 = vrcp.pop %v749
        %v751 = vmul.f32 %v746, %v750
        %v753 = vsel %vm710, %v751, 0
        %755 = vmatpush.msra.mxu0 0.0
        %756 = vmatpush.msra.mxu0 0.0
        %757 = vmatpush.msra.mxu0 0.0
        %758 = vmatpush.msra.mxu0 0.0
        %759 = vmatpush.msra.mxu0 0.0
        %760 = vmatpush.msra.mxu0 0.0
        %761 = vmatpush.msra.mxu0 0.0
        %762 = vmatpush.msra.mxu0 0.0
        %763 = vmatpush.msra.mxu0 0.0
        %764 = vmatpush.msra.mxu0 0.0
        %765 = vmatpush.msra.mxu0 0.0
        %766 = vmatpush.msra.mxu0 0.0
        %767 = vmatpush.msra.mxu0 0.0
        %768 = vmatpush.msra.mxu0 0.0
        %769 = vmatpush.msra.mxu0 %v708
        %770 = vmatpush.msra.mxu0 %v705
        %771 = vmatmul.f32.gmra.mxu0 %v753
        %v772 = vpop.f32.mrf.mxu0
        %v773 = vadd.f32 0.0, %v772
        %774 = vdwg.mxu0
        %v775 = vld [vmem:[%s12] sm:$0xff]
        %v776 = vld [vmem:[%s12 + $0x8] sm:$0xff]
        %v778 = vsel %vm710, %v773, 0
        %780 = vmatpush.msra.mxu0 0.0
        %781 = vmatpush.msra.mxu0 0.0
        %782 = vmatpush.msra.mxu0 0.0
        %783 = vmatpush.msra.mxu0 0.0
        %784 = vmatpush.msra.mxu0 0.0
        %785 = vmatpush.msra.mxu0 0.0
        %786 = vmatpush.msra.mxu0 0.0
        %787 = vmatpush.msra.mxu0 0.0
        %788 = vmatpush.msra.mxu0 0.0
        %789 = vmatpush.msra.mxu0 0.0
        %790 = vmatpush.msra.mxu0 0.0
        %791 = vmatpush.msra.mxu0 0.0
        %792 = vmatpush.msra.mxu0 0.0
        %793 = vmatpush.msra.mxu0 0.0
        %794 = vmatpush.msra.mxu0 %v776
        %795 = vmatpush.msra.mxu0 %v775
        %796 = vmatmul.f32.gmra.mxu0 %v778
        %v797 = vpop.f32.mrf.mxu0
        %v798 = vadd.f32 0.0, %v797
        %799 = vdwg.mxu0
        %v800 = vadd.f32 %v602, %v798
        %s801 = scalar_lea.vmem %s6, 32
        %v802 = vld [vmem:[%s801] sm:$0xff]
        %v803 = vld [vmem:[%s801 + $0x8] sm:$0xff]
        %v804 = vld [vmem:[%s801 + $0x10] sm:$0xff]
        %v805 = vld [vmem:[%s801 + $0x18] sm:$0xff]
        %s806 = scalar_lea.vmem %s7, 1
        %v807 = vld [vmem:[%s806] sm:$0x1]
        %v809 = vperm.slane %v807, 0
        %811 = vmatpush.msra.mxu0 0.0
        %812 = vmatpush.msra.mxu0 0.0
        %813 = vmatpush.msra.mxu0 0.0
        %814 = vmatpush.msra.mxu0 0.0
        %815 = vmatpush.msra.mxu0 0.0
        %816 = vmatpush.msra.mxu0 0.0
        %817 = vmatpush.msra.mxu0 0.0
        %818 = vmatpush.msra.mxu0 0.0
        %819 = vmatpush.msra.mxu0 0.0
        %820 = vmatpush.msra.mxu0 0.0
        %821 = vmatpush.msra.mxu0 0.0
        %822 = vmatpush.msra.mxu0 0.0
        %823 = vmatpush.msra.mxu0 %v805
        %824 = vmatpush.msra.mxu0 %v804
        %825 = vmatpush.msra.mxu0 %v803
        %826 = vmatpush.msra.mxu0 %v802
        %827 = vmatmul.f32.gmra.mxu0 %v612
        %v828 = vpop.f32.mrf.mxu0
        %v829 = vadd.f32 %v809, %v828
        %830 = vdwg.mxu0
        %s831 = scalar_lea.vmem %s8, 64
        %v832 = vld [vmem:[%s831] sm:$0xff]
        %v833 = vld [vmem:[%s831 + $0x8] sm:$0xff]
        %v834 = vld [vmem:[%s831 + $0x10] sm:$0xff]
        %v835 = vld [vmem:[%s831 + $0x18] sm:$0xff]
        %v836 = vld [vmem:[%s831 + $0x20] sm:$0xff]
        %v837 = vld [vmem:[%s831 + $0x28] sm:$0xff]
        %v838 = vld [vmem:[%s831 + $0x30] sm:$0xff]
        %v839 = vld [vmem:[%s831 + $0x38] sm:$0xff]
        %s840 = scalar_lea.vmem %s9, 1
        %v841 = vld [vmem:[%s840] sm:$0x1]
        %v843 = vperm.slane %v841, 0
        %845 = vmatpush.msra.mxu0 0.0
        %846 = vmatpush.msra.mxu0 0.0
        %847 = vmatpush.msra.mxu0 0.0
        %848 = vmatpush.msra.mxu0 0.0
        %849 = vmatpush.msra.mxu0 0.0
        %850 = vmatpush.msra.mxu0 0.0
        %851 = vmatpush.msra.mxu0 0.0
        %852 = vmatpush.msra.mxu0 0.0
        %853 = vmatpush.msra.mxu0 %v839
        %854 = vmatpush.msra.mxu0 %v838
        %855 = vmatpush.msra.mxu0 %v837
        %856 = vmatpush.msra.mxu0 %v836
        %857 = vmatpush.msra.mxu0 %v835
        %858 = vmatpush.msra.mxu0 %v834
        %859 = vmatpush.msra.mxu0 %v833
        %860 = vmatpush.msra.mxu0 %v832
        %861 = vmatmul.f32.gmra.mxu0 %v647
        %v862 = vpop.f32.mrf.mxu0
        %v863 = vadd.f32 %v843, %v862
        %864 = vmatmul.f32.gmra.mxu0 %v650
        %v865 = vpop.f32.mrf.mxu0
        %v866 = vadd.f32 %v843, %v865
        %867 = vdwg.mxu0
        %s868 = scalar_lea.vmem %s10, 64
        %v869 = vld [vmem:[%s868] sm:$0xff]
        %v870 = vld [vmem:[%s868 + $0x8] sm:$0xff]
        %v871 = vld [vmem:[%s868 + $0x10] sm:$0xff]
        %v872 = vld [vmem:[%s868 + $0x18] sm:$0xff]
        %v873 = vld [vmem:[%s868 + $0x20] sm:$0xff]
        %v874 = vld [vmem:[%s868 + $0x28] sm:$0xff]
        %v875 = vld [vmem:[%s868 + $0x30] sm:$0xff]
        %v876 = vld [vmem:[%s868 + $0x38] sm:$0xff]
        %s877 = scalar_lea.vmem %s11, 1
        %v878 = vld [vmem:[%s877] sm:$0x1]
        %v880 = vperm.slane %v878, 0
        %882 = vmatpush.msra.mxu0 0.0
        %883 = vmatpush.msra.mxu0 0.0
        %884 = vmatpush.msra.mxu0 0.0
        %885 = vmatpush.msra.mxu0 0.0
        %886 = vmatpush.msra.mxu0 0.0
        %887 = vmatpush.msra.mxu0 0.0
        %888 = vmatpush.msra.mxu0 0.0
        %889 = vmatpush.msra.mxu0 0.0
        %890 = vmatpush.msra.mxu0 %v876
        %891 = vmatpush.msra.mxu0 %v875
        %892 = vmatpush.msra.mxu0 %v874
        %893 = vmatpush.msra.mxu0 %v873
        %894 = vmatpush.msra.mxu0 %v872
        %895 = vmatpush.msra.mxu0 %v871
        %896 = vmatpush.msra.mxu0 %v870
        %897 = vmatpush.msra.mxu0 %v869
        %898 = vmatmul.f32.gmra.mxu0 %v647
        %v899 = vpop.f32.mrf.mxu0
        %v900 = vadd.f32 %v880, %v899
        %901 = vmatmul.f32.gmra.mxu0 %v650
        %v902 = vpop.f32.mrf.mxu0
        %v903 = vadd.f32 %v880, %v902
        %904 = vdwg.mxu0
        %v906 = vsel %vm710, %v829, 0
        %v909 = vsel %vm710, %v863, 0
        %v912 = vsel %vm710, %v866, 0
        %914 = vmatpush.xpose.msra.mxu0 0.0
        %915 = vmatpush.xpose.msra.mxu0 0.0
        %916 = vmatpush.xpose.msra.mxu0 0.0
        %917 = vmatpush.xpose.msra.mxu0 0.0
        %918 = vmatpush.xpose.msra.mxu0 0.0
        %919 = vmatpush.xpose.msra.mxu0 0.0
        %920 = vmatpush.xpose.msra.mxu0 0.0
        %921 = vmatpush.xpose.msra.mxu0 0.0
        %922 = vmatpush.xpose.msra.mxu0 0.0
        %923 = vmatpush.xpose.msra.mxu0 0.0
        %924 = vmatpush.xpose.msra.mxu0 0.0
        %925 = vmatpush.xpose.msra.mxu0 0.0
        %926 = vmatpush.xpose.msra.mxu0 0.0
        %927 = vmatpush.xpose.msra.mxu0 0.0
        %928 = vmatpush.xpose.msra.mxu0 %v912
        %929 = vmatpush.xpose.msra.mxu0 %v909
        %930 = vmatmul.f32.gmra.mxu0 %v906
        %v931 = vpop.f32.mrf.mxu0
        %v932 = vadd.f32 0.0, %v931
        %933 = vdwg.mxu0
        %v934 = vmul.f32 %v932, 0.25
        %v935 = vsel %vm710, %v934, -inf
        %936 = vmax.xlane.f32.xlu0 %v935
        %v937 = vpop.xlane.xlu0 %936
        %v938 = vsub.f32 %v934, %v937
        %v939 = vmul.f32 %v938, 1.442695
        %v940 = vpow.pop %v939
        %v941 = vsel %vm710, %v940, 0.0
        %942 = vadd.xlane.f32.xlu0 %v941
        %v943 = vpop.xlane.xlu0 %942
        %v944 = vrcp.pop %v943
        %v945 = vmul.f32 %v940, %v944
        %v947 = vsel %vm710, %v945, 0
        %949 = vmatpush.msra.mxu0 0.0
        %950 = vmatpush.msra.mxu0 0.0
        %951 = vmatpush.msra.mxu0 0.0
        %952 = vmatpush.msra.mxu0 0.0
        %953 = vmatpush.msra.mxu0 0.0
        %954 = vmatpush.msra.mxu0 0.0
        %955 = vmatpush.msra.mxu0 0.0
        %956 = vmatpush.msra.mxu0 0.0
        %957 = vmatpush.msra.mxu0 0.0
        %958 = vmatpush.msra.mxu0 0.0
        %959 = vmatpush.msra.mxu0 0.0
        %960 = vmatpush.msra.mxu0 0.0
        %961 = vmatpush.msra.mxu0 0.0
        %962 = vmatpush.msra.mxu0 0.0
        %963 = vmatpush.msra.mxu0 %v903
        %964 = vmatpush.msra.mxu0 %v900
        %965 = vmatmul.f32.gmra.mxu0 %v947
        %v966 = vpop.f32.mrf.mxu0
        %v967 = vadd.f32 0.0, %v966
        %968 = vdwg.mxu0
        %s969 = scalar_lea.vmem %s12, 16
        %v970 = vld [vmem:[%s969] sm:$0xff]
        %v971 = vld [vmem:[%s969 + $0x8] sm:$0xff]
        %v973 = vsel %vm710, %v967, 0
        %975 = vmatpush.msra.mxu0 0.0
        %976 = vmatpush.msra.mxu0 0.0
        %977 = vmatpush.msra.mxu0 0.0
        %978 = vmatpush.msra.mxu0 0.0
        %979 = vmatpush.msra.mxu0 0.0
        %980 = vmatpush.msra.mxu0 0.0
        %981 = vmatpush.msra.mxu0 0.0
        %982 = vmatpush.msra.mxu0 0.0
        %983 = vmatpush.msra.mxu0 0.0
        %984 = vmatpush.msra.mxu0 0.0
        %985 = vmatpush.msra.mxu0 0.0
        %986 = vmatpush.msra.mxu0 0.0
        %987 = vmatpush.msra.mxu0 0.0
        %988 = vmatpush.msra.mxu0 0.0
        %989 = vmatpush.msra.mxu0 %v971
        %990 = vmatpush.msra.mxu0 %v970
        %991 = vmatmul.f32.gmra.mxu0 %v973
        %v992 = vpop.f32.mrf.mxu0
        %v993 = vadd.f32 0.0, %v992
        %994 = vdwg.mxu0
        %v995 = vadd.f32 %v800, %v993
        %996 = vst.msk [vmem:[%s474] sm:$0xff] %vm490, %v995
        %s997 = sand.u32 %s340, 1
        %s998 = scalar_lea.sflag [#allocation3], %s997
        %s999 = sand.u32 %s340, 1
        %s1000 = smul.addr %s999, 8
        %s1001 = scalar_lea.vmem [#allocation2], %s1000
        // Predicated region
        $region77: #{tpu_custom_call.1} parent=75 // pred_check
          %p1002 = pneg %p350
        $region78: #{tpu_custom_call.1} parent=75 // pred_check_branch
          %1004 = sbr.rel (%p1002) target = $region80
        $region79: #{tpu_custom_call.1} parent=75 // pred_region
          %1006 = vsyncadd %s998, 0
          %s1007 = smul.addr %s28, 8
          %s1008 = scalar_lea.hbm %s14, %s1007
          %s1010 = sshll.u32 %s1001, 4
          %s1011 = int_to_ptr.vmem [resolvable:$true] %s1010
          %s1012 = sshll.u32 %s1008, 4
          %s1013 = int_to_ptr.hbm [resolvable:$true] %s1012
          %1015 = dma.vmem_to_hbm [thread:$0]  %s1011, 128, %s1013, %s998
        $region80: #{tpu_custom_call.1} parent=75 // pred_fallthru
          _
      $region76: #{tpu_custom_call.1} parent=5 // pred_fallthru
        _
      %p1016 = scmp.le.s32.totalorder 2, %s23
      // Predicated region
      $region81: #{tpu_custom_call.1} parent=5 // pred_check
        %p1017 = pneg %p1016
      $region82: #{tpu_custom_call.1} parent=5 // pred_check_branch
        %1019 = sbr.rel (%p1017) target = $region84
      $region83: #{tpu_custom_call.1} parent=5 // pred_region
        %s1020 = ssub.s32 %s23, 2
        // Predicated region
        $region85: #{tpu_custom_call.1} parent=83 // pred_check
          %p1021 = pneg %p356
        $region86: #{tpu_custom_call.1} parent=83 // pred_check_branch
          %1023 = sbr.rel (%p1021) target = $region88
        $region87: #{tpu_custom_call.1} parent=83 // pred_region
          %s1024 = sand.u32 %s341, 1
          %s1025 = scalar_lea.sflag [#allocation3], %s1024
          %s1026 = sand.u32 %s341, 1
          %s1027 = smul.addr %s1026, 8
          %s1028 = scalar_lea.vmem [#allocation2], %s1027
          %1030 = dma.done %s1025, 128
        $region88: #{tpu_custom_call.1} parent=83 // pred_fallthru
          _
      $region84: #{tpu_custom_call.1} parent=5 // pred_fallthru
        _
    $region6: #{tpu_custom_call.1} parent=1 // loop_footer
      %s27 = sadd.s32 1, %s23
    $region7: #{tpu_custom_call.1} parent=1 // loop_footer_branch
      %22 = sbr.rel target = $region3
    $region8: #{tpu_custom_call.1} parent=1 // loop_exit
      _
    %1031 = vsyncpa [#allocation3], 1
    %s1032 = scalar_lea.sflag [#allocation3], 1
    %1033 = vsyncpa %s1032, 1

</llo_original>
